<compile_context>
chip_gen: v5e
topology: v5e:2x2
jax: 0.10.0
libtpu: 0.0.40
codegen_flags: <defaults>
</compile_context>

<pallas_src>
import functools

import jax
import jax.numpy as jnp
from jax.experimental import pallas as pl
from jax.experimental.pallas import tpu as pltpu

HIDDEN = 60                    # per-power output channels
HP = 64                        # lane-padded per-power block width
NUM_POWERS = 3
FEAT = HIDDEN * NUM_POWERS     # 180 (original feature count)
FEAT_PAD = HP * NUM_POWERS     # 192 (internal, lane aligned)
CLASS_PAD = 128                # lane-dense classifier output width
BN_EPS = 1e-5
NODE_ALIGN = 128               # node-count padding (adj lanes / chunk sublanes)


# ----------------------------------------------------------------------------
# Fused Pallas kernel: streamed adjacency + 3x (MixHopConv+BN) + Linear
# ----------------------------------------------------------------------------
def mixhop_fused_kernel(nchunks, chunk_rows,
                        x_ref, a_raw_ref, dis_row_ref, dis_col_ref,
                        wc1_ref, b1_ref, wc2_ref, b2_ref, wc3_ref, b3_ref,
                        wlin_ref, blin_ref,
                        out_ref,
                        adj_vmem, hop_vmem, sem):
    f32, bf16 = jnp.float32, jnp.bfloat16

    # 1) queue every adjacency row-chunk DMA (HBM -> VMEM) up front.
    copies = []
    for c in range(nchunks):
        rows = pl.ds(c * chunk_rows, chunk_rows)
        cp = pltpu.make_async_copy(a_raw_ref.at[rows, :], adj_vmem.at[rows, :],
                                   sem.at[c])
        cp.start()
        copies.append(cp)

    # 2) layer-1 projection needs no adjacency -> overlaps the DMAs.
    #    internal column order is [power2 | power1 | power0] (64 lanes each),
    #    so every slab that gets re-propagated starts at lane offset 0.
    y1 = jnp.dot(x_ref[...], wc1_ref[...], preferred_element_type=f32)  # [N,192]
    y1p = y1[:, :2 * HP].astype(bf16)                                   # [y2|y1]

    # 3) per chunk: wait, gcn-normalize in place (VPU), and run this chunk's
    #    rows of the first propagation (MXU) while later chunks stream.
    dcol = dis_col_ref[...]
    for c in range(nchunks):
        copies[c].wait()
        rows = pl.ds(c * chunk_rows, chunk_rows)
        a_blk = (adj_vmem[rows, :].astype(f32) *
                 (dis_row_ref[rows, :] * dcol)).astype(bf16)
        adj_vmem[rows, :] = a_blk
        hop_vmem[rows, :] = jnp.dot(a_blk, y1p, preferred_element_type=f32)

    adj = adj_vmem[...]        # fully resident, gcn-normalized, bf16

    # 4) finish layer 1: second hop + assemble [A^2 y2 | A y1 | y0] + bias.
    z1 = hop_vmem[...]
    h2 = jnp.dot(adj, z1[:, :HP].astype(bf16), preferred_element_type=f32)
    h = jnp.concatenate([h2, z1[:, HP:], y1[:, 2 * HP:]], axis=-1) + b1_ref[...]

    # 5) layers 2 & 3 (BN folded into wc/b; propagation slabs lane-aligned).
    def wide_layer(h_in, wc_ref, b_ref):
        y = jnp.dot(h_in.astype(bf16), wc_ref[...], preferred_element_type=f32)
        z = jnp.dot(adj, y[:, :2 * HP].astype(bf16), preferred_element_type=f32)
        hh = jnp.dot(adj, z[:, :HP].astype(bf16), preferred_element_type=f32)
        return jnp.concatenate([hh, z[:, HP:], y[:, 2 * HP:]], axis=-1) + b_ref[...]

    h = wide_layer(h, wc2_ref, b2_ref)
    h = wide_layer(h, wc3_ref, b3_ref)

    # 6) classifier kept in f32 (cheap; preserves logit precision).
    out_ref[...] = (jnp.dot(h, wlin_ref[...], preferred_element_type=f32)
                    + blin_ref[...])


# ----------------------------------------------------------------------------
# Trace-time helpers: BN folding, internal (lane-aligned) layout, VMEM budget
# ----------------------------------------------------------------------------
def _round_up(v, m):
    return (v + m - 1) // m * m


def _vmem_capacity_bytes():
    try:
        info = pltpu.get_tpu_info()
        cap = int(getattr(info, "vmem_capacity_bytes", 0))
        if cap > 0:
            return cap
    except Exception:
        pass
    return 64 * 1024 * 1024          # conservative (v7x-sized) fallback


def _vmem_bytes_needed(n_pad, cin):
    b = 2 * n_pad * n_pad                                  # bf16 adjacency scratch
    b += 4 * n_pad * 2 * HP                                # f32 first-hop scratch
    b += 4 * n_pad * CLASS_PAD                             # f32 output
    b += 2 * n_pad * cin                                   # bf16 x
    b += 10 * 4 * n_pad * FEAT_PAD                         # live f32 layer slabs
    b += 2 * (cin * FEAT_PAD + 2 * FEAT_PAD * FEAT_PAD)    # bf16 weights
    b += 4 * (FEAT_PAD * CLASS_PAD + 3 * FEAT_PAD + CLASS_PAD + 2 * n_pad)
    return b


def _fold_bn(layer):
    """Fold eval-mode BatchNorm into the per-power projections (trace time)."""
    s = layer["gamma"] * jax.lax.rsqrt(layer["var"] + BN_EPS)            # [1,180]
    b_cat = jnp.concatenate([layer["b0"], layer["b1"], layer["b2"]], -1)
    b_eff = (b_cat - layer["mean"]) * s + layer["beta"]                  # [1,180]
    w_eff = [layer["w%d" % k] * s[:, k * HIDDEN:(k + 1) * HIDDEN]
             for k in range(NUM_POWERS)]
    return w_eff, b_eff


def _to_internal_rows(w):
    """[180,M] rows in original order [p0|p1|p2] -> [192,M] internal [p2|p1|p0]."""
    out = jnp.zeros((FEAT_PAD, w.shape[1]), w.dtype)
    out = out.at[0:HIDDEN].set(w[2 * HIDDEN:3 * HIDDEN])
    out = out.at[HP:HP + HIDDEN].set(w[HIDDEN:2 * HIDDEN])
    out = out.at[2 * HP:2 * HP + HIDDEN].set(w[0:HIDDEN])
    return out


def _cat_cols_internal(w0, w1, w2):
    """Per-power [K,60] weights -> [K,192] with column blocks [W2|W1|W0]."""
    k = w0.shape[0]
    out = jnp.zeros((k, FEAT_PAD), w0.dtype)
    out = out.at[:, 0:HIDDEN].set(w2)
    out = out.at[:, HP:HP + HIDDEN].set(w1)
    out = out.at[:, 2 * HP:2 * HP + HIDDEN].set(w0)
    return out


def _internal_bias(b):               # [1,180] original -> [1,192] internal
    return _to_internal_rows(b.T).T


def _cost_estimate(n_pad, cin):
    proj = 2 * n_pad * cin * FEAT_PAD + 2 * 2 * n_pad * FEAT_PAD * FEAT_PAD
    hops = 3 * 2 * n_pad * n_pad * (3 * HP)
    norm = 3 * n_pad * n_pad
    cls = 2 * n_pad * FEAT_PAD * CLASS_PAD
    bytes_accessed = 2 * n_pad * n_pad + 2 * n_pad * cin + 4 * n_pad * CLASS_PAD
    bytes_accessed += 2 * (cin * FEAT_PAD + 2 * FEAT_PAD * FEAT_PAD)
    bytes_accessed += 4 * (FEAT_PAD * CLASS_PAD + 3 * FEAT_PAD + CLASS_PAD + 2 * n_pad)
    return pl.CostEstimate(flops=proj + hops + norm + cls, transcendentals=0,
                           bytes_accessed=bytes_accessed)


# ----------------------------------------------------------------------------
# Wrapper: padding, weight layout, single pallas_call
# ----------------------------------------------------------------------------
def mixhop_fused_forward(x, a_raw, dis, params):
    n, cin = x.shape
    num_classes = params["lin_w"].shape[1]
    n_pad = _round_up(max(n, NODE_ALIGN), NODE_ALIGN)
    nchunks = 8 if n_pad >= 1024 else 4
    chunk_rows = n_pad // nchunks

    # ---- generation-aware VMEM budget / resident-graph guard ---------------
    cap = _vmem_capacity_bytes()
    avail = cap - 16 * 1024 * 1024          # headroom for compiler scratch
    need = _vmem_bytes_needed(n_pad, cin)
    if need + 8 * 1024 * 1024 > avail:
        # TODO(synk): tiled grid / block-sparse adjacency path for big graphs.
        raise NotImplementedError(
            "graph too large for whole-adjacency-resident kernel on this TPU "
            f"(need ~{need >> 20} MiB VMEM, available ~{max(avail, 0) >> 20} MiB)")
    vmem_limit = min(avail, need + 8 * 1024 * 1024)

    bf16, f32 = jnp.bfloat16, jnp.float32

    # ---- fold BN, reorder to the lane-aligned internal layout --------------
    we1, b1 = _fold_bn(params["layer1"])
    we2, b2 = _fold_bn(params["layer2"])
    we3, b3 = _fold_bn(params["layer3"])
    wc1 = _cat_cols_internal(*we1)                                    # [cin,192]
    wc2 = _cat_cols_internal(*[_to_internal_rows(w) for w in we2])    # [192,192]
    wc3 = _cat_cols_internal(*[_to_internal_rows(w) for w in we3])    # [192,192]
    b1i, b2i, b3i = _internal_bias(b1), _internal_bias(b2), _internal_bias(b3)

    # classifier stays f32 (precision ~free); lane-pad output to 128.
    wlin = jnp.zeros((FEAT_PAD, CLASS_PAD), f32)
    wlin = wlin.at[:, :num_classes].set(_to_internal_rows(params["lin_w"]))
    blin = jnp.zeros((1, CLASS_PAD), f32).at[:, :num_classes].set(params["lin_b"])

    # ---- node-dim padding (zero rows/cols never touch real nodes) ----------
    x_p = jnp.pad(x.astype(bf16), ((0, n_pad - n), (0, 0)))
    a_p = jnp.pad(a_raw.astype(bf16), ((0, n_pad - n), (0, n_pad - n)))
    dis_p = jnp.pad(dis.astype(f32), (0, n_pad - n))
    dis_row = dis_p.reshape(n_pad, 1)
    dis_col = dis_p.reshape(1, n_pad)

    args = (x_p, a_p, dis_row, dis_col,
            wc1.astype(bf16), b1i, wc2.astype(bf16), b2i, wc3.astype(bf16), b3i,
            wlin, blin)

    vmem = pl.BlockSpec(memory_space=pltpu.MemorySpace.VMEM)
    in_specs = [vmem, pl.BlockSpec(memory_space=pl.ANY)] + [vmem] * 10

    out = pl.pallas_call(
        functools.partial(mixhop_fused_kernel, nchunks, chunk_rows),
        out_shape=jax.ShapeDtypeStruct((n_pad, CLASS_PAD), f32),
        in_specs=in_specs,
        out_specs=vmem,
        scratch_shapes=[
            pltpu.VMEM((n_pad, n_pad), bf16),     # adjacency, normalized in place
            pltpu.VMEM((n_pad, 2 * HP), f32),     # layer-1 first-hop rows
            pltpu.SemaphoreType.DMA((nchunks,)),
        ],
        compiler_params=pltpu.CompilerParams(vmem_limit_bytes=vmem_limit),
        cost_estimate=_cost_estimate(n_pad, cin),
    )(*args)
    return out[:n, :num_classes]


# ----------------------------------------------------------------------------
# Adjacency build (cacheable across calls) and jitted forward
# ----------------------------------------------------------------------------
def build_gcn_adjacency(edge_index, num_nodes):
    """Unnormalized dense A (+remaining self-loops) in bf16 (entries are exact
    0/1) and deg^-1/2.  The D^-1/2 row/col scaling + bf16 requantization run
    on-chip inside the kernel, so no f32 [N,N] intermediate hits HBM.  For a
    static graph, cache this pair across forward calls."""
    src, dst = edge_index[0], edge_index[1]
    a = jnp.zeros((num_nodes, num_nodes), jnp.bfloat16).at[dst, src].add(1.0)
    a = jnp.maximum(a, jnp.eye(num_nodes, dtype=jnp.bfloat16))  # add_remaining_self_loops
    deg = jnp.sum(a, axis=1, dtype=jnp.float32)
    dis = jnp.where(deg > 0, jax.lax.rsqrt(deg), 0.0)
    return a, dis


@functools.partial(jax.jit, static_argnums=(3,))
def mixhop_forward(params, x, edge_index, num_nodes):
    a_raw, dis = build_gcn_adjacency(edge_index, num_nodes)
    return mixhop_fused_forward(x, a_raw, dis, params)


# ----------------------------------------------------------------------------
# Pure-JAX f32 reference (original op order, explicit BatchNorm)
# ----------------------------------------------------------------------------
def gcn_norm_dense(edge_index, num_nodes):
    src, dst = edge_index[0], edge_index[1]
    a = jnp.zeros((num_nodes, num_nodes), jnp.float32).at[dst, src].add(1.0)
    a = jnp.maximum(a, jnp.eye(num_nodes, dtype=jnp.float32))
    deg = a.sum(axis=1)
    dis = jnp.where(deg > 0, jax.lax.rsqrt(deg), 0.0)
    return dis[:, None] * a * dis[None, :]


def _ref_layer(x, adj, p):
    x1 = adj @ x
    x2 = adj @ x1
    h = jnp.concatenate([x @ p["w0"] + p["b0"],
                         x1 @ p["w1"] + p["b1"],
                         x2 @ p["w2"] + p["b2"]], axis=-1)
    return (h - p["mean"]) / jnp.sqrt(p["var"] + BN_EPS) * p["gamma"] + p["beta"]


def mixhop_reference(params, x, edge_index, num_nodes):
    adj = gcn_norm_dense(edge_index, num_nodes)
    h = _ref_layer(x, adj, params["layer1"])
    h = _ref_layer(h, adj, params["layer2"])
    h = _ref_layer(h, adj, params["layer3"])
    return h @ params["lin_w"] + params["lin_b"]


# ----------------------------------------------------------------------------
# Parameter init (non-trivial BN running stats exercise the folding path)
# ----------------------------------------------------------------------------
def init_mixhop_bn_params(key, in_dim):
    ks = jax.random.split(key, 10)

    def glorot(k, shape):
        limit = jnp.sqrt(6.0 / (shape[0] + shape[1]))
        return jax.random.uniform(k, shape, jnp.float32, -limit, limit)

    return {
        "w0": glorot(ks[0], (in_dim, HIDDEN)),
        "b0": 0.05 * jax.random.normal(ks[1], (1, HIDDEN), jnp.float32),
        "w1": glorot(ks[2], (in_dim, HIDDEN)),
        "b1": 0.05 * jax.random.normal(ks[3], (1, HIDDEN), jnp.float32),
        "w2": glorot(ks[4], (in_dim, HIDDEN)),
        "b2": 0.05 * jax.random.normal(ks[5], (1, HIDDEN), jnp.float32),
        "gamma": 1.0 + 0.2 * jax.random.uniform(ks[6], (1, FEAT), jnp.float32, -1.0, 1.0),
        "beta": 0.1 * jax.random.normal(ks[7], (1, FEAT), jnp.float32),
        "mean": 0.1 * jax.random.normal(ks[8], (1, FEAT), jnp.float32),
        "var": 1.0 + 0.2 * jax.random.uniform(ks[9], (1, FEAT), jnp.float32, -1.0, 1.0),
    }


def init_params(key, input_dim, num_classes):
    k1, k2, k3, k4 = jax.random.split(key, 4)
    limit = jnp.sqrt(6.0 / (FEAT + num_classes))
    return {
        "layer1": init_mixhop_bn_params(k1, input_dim),
        "layer2": init_mixhop_bn_params(k2, FEAT),
        "layer3": init_mixhop_bn_params(k3, FEAT),
        "lin_w": jax.random.uniform(k4, (FEAT, num_classes), jnp.float32,
                                    -limit, limit),
        "lin_b": jnp.zeros((1, num_classes), jnp.float32),
    }


# ----------------------------------------------------------------------------
if __name__ == "__main__":
    N = 32            # nodes
    INPUT_DIM = 16
    NUM_CLASSES = 7

    key = jax.random.PRNGKey(0)
    kx, kp = jax.random.split(key)

    x = jax.random.normal(kx, (N, INPUT_DIM), jnp.float32)

    # deterministic ring graph (undirected): i <-> (i+1) % N
    idx = jnp.arange(N, dtype=jnp.int32)
    src = jnp.concatenate([idx, (idx + 1) % N])
    dst = jnp.concatenate([(idx + 1) % N, idx])
    edge_index = jnp.stack([src, dst], axis=0)            # [2, 2N]

    params = init_params(kp, INPUT_DIM, NUM_CLASSES)

    out = mixhop_forward(params, x, edge_index, N)
    out = jax.block_until_ready(out)

    ref = mixhop_reference(params, x, edge_index, N)
    assert out.shape == (N, NUM_CLASSES)
    # bf16 MXU inputs + BN folding + matmul re-association change rounding;
    # comparison vs the f32 reference uses a correspondingly loosened tolerance.
    assert jnp.allclose(out, ref, rtol=5e-2, atol=5e-2), "mismatch vs reference"

    print("KERNEL_OK")
</pallas_src>

<mosaic_0001>
module attributes {stable_mosaic.version = 11 : i64} {
  func.func @mixhop_fused_kernel(%arg0: memref<128x16xbf16, #tpu.memory_space<vmem>>, %arg1: memref<128x128xbf16, #tpu.memory_space<any>>, %arg2: memref<128x1xf32, #tpu.memory_space<vmem>>, %arg3: memref<1x128xf32, #tpu.memory_space<vmem>>, %arg4: memref<16x192xbf16, #tpu.memory_space<vmem>>, %arg5: memref<1x192xf32, #tpu.memory_space<vmem>>, %arg6: memref<192x192xbf16, #tpu.memory_space<vmem>>, %arg7: memref<1x192xf32, #tpu.memory_space<vmem>>, %arg8: memref<192x192xbf16, #tpu.memory_space<vmem>>, %arg9: memref<1x192xf32, #tpu.memory_space<vmem>>, %arg10: memref<192x128xf32, #tpu.memory_space<vmem>>, %arg11: memref<1x128xf32, #tpu.memory_space<vmem>>, %arg12: memref<128x128xf32, #tpu.memory_space<vmem>>, %arg13: memref<128x128xbf16, #tpu.memory_space<vmem>>, %arg14: memref<128x128xf32, #tpu.memory_space<vmem>>, %arg15: memref<4x!tpu.dma_semaphore, #tpu.memory_space<semaphore_mem>>) attributes {dimension_semantics = [], scalar_prefetch = 0 : i64, scratch_operands = 3 : i64, tpu.core_type = #tpu.core_type<tc>} {
    %c0_i32 = arith.constant 0 : i32
    %c0_i32_0 = arith.constant 0 : i32
    %c0_i32_1 = arith.constant 0 : i32
    %0 = tpu.memref_slice %arg1[%c0_i32_0, %c0_i32_1] : memref<128x128xbf16, #tpu.memory_space<any>> -> memref<32x128xbf16, #tpu.memory_space<any>>
    %c0_i32_2 = arith.constant 0 : i32
    %c0_i32_3 = arith.constant 0 : i32
    %1 = tpu.memref_slice %arg13[%c0_i32_2, %c0_i32_3] : memref<128x128xbf16, #tpu.memory_space<vmem>> -> memref<32x128xbf16, #tpu.memory_space<vmem>>
    %2 = tpu.memref_slice %arg15[%c0_i32] : memref<4x!tpu.dma_semaphore, #tpu.memory_space<semaphore_mem>> -> memref<1x!tpu.dma_semaphore, #tpu.memory_space<semaphore_mem>>
    %3 = tpu.memref_squeeze %2 : memref<1x!tpu.dma_semaphore, #tpu.memory_space<semaphore_mem>> -> memref<!tpu.dma_semaphore, #tpu.memory_space<semaphore_mem>>
    tpu.enqueue_dma source(%0 : memref<32x128xbf16, #tpu.memory_space<any>>) target(%1 : memref<32x128xbf16, #tpu.memory_space<vmem>>) target_semaphore(%3 : memref<!tpu.dma_semaphore, #tpu.memory_space<semaphore_mem>>)
    %c1_i32 = arith.constant 1 : i32
    %c32_i32 = arith.constant 32 : i32
    %c0_i32_4 = arith.constant 0 : i32
    %4 = tpu.memref_slice %arg1[%c32_i32, %c0_i32_4] : memref<128x128xbf16, #tpu.memory_space<any>> -> memref<32x128xbf16, #tpu.memory_space<any>>
    %c32_i32_5 = arith.constant 32 : i32
    %c0_i32_6 = arith.constant 0 : i32
    %5 = tpu.memref_slice %arg13[%c32_i32_5, %c0_i32_6] : memref<128x128xbf16, #tpu.memory_space<vmem>> -> memref<32x128xbf16, #tpu.memory_space<vmem>>
    %6 = tpu.memref_slice %arg15[%c1_i32] : memref<4x!tpu.dma_semaphore, #tpu.memory_space<semaphore_mem>> -> memref<1x!tpu.dma_semaphore, #tpu.memory_space<semaphore_mem>>
    %7 = tpu.memref_squeeze %6 : memref<1x!tpu.dma_semaphore, #tpu.memory_space<semaphore_mem>> -> memref<!tpu.dma_semaphore, #tpu.memory_space<semaphore_mem>>
    tpu.enqueue_dma source(%4 : memref<32x128xbf16, #tpu.memory_space<any>>) target(%5 : memref<32x128xbf16, #tpu.memory_space<vmem>>) target_semaphore(%7 : memref<!tpu.dma_semaphore, #tpu.memory_space<semaphore_mem>>)
    %c2_i32 = arith.constant 2 : i32
    %c64_i32 = arith.constant 64 : i32
    %c0_i32_7 = arith.constant 0 : i32
    %8 = tpu.memref_slice %arg1[%c64_i32, %c0_i32_7] : memref<128x128xbf16, #tpu.memory_space<any>> -> memref<32x128xbf16, #tpu.memory_space<any>>
    %c64_i32_8 = arith.constant 64 : i32
    %c0_i32_9 = arith.constant 0 : i32
    %9 = tpu.memref_slice %arg13[%c64_i32_8, %c0_i32_9] : memref<128x128xbf16, #tpu.memory_space<vmem>> -> memref<32x128xbf16, #tpu.memory_space<vmem>>
    %10 = tpu.memref_slice %arg15[%c2_i32] : memref<4x!tpu.dma_semaphore, #tpu.memory_space<semaphore_mem>> -> memref<1x!tpu.dma_semaphore, #tpu.memory_space<semaphore_mem>>
    %11 = tpu.memref_squeeze %10 : memref<1x!tpu.dma_semaphore, #tpu.memory_space<semaphore_mem>> -> memref<!tpu.dma_semaphore, #tpu.memory_space<semaphore_mem>>
    tpu.enqueue_dma source(%8 : memref<32x128xbf16, #tpu.memory_space<any>>) target(%9 : memref<32x128xbf16, #tpu.memory_space<vmem>>) target_semaphore(%11 : memref<!tpu.dma_semaphore, #tpu.memory_space<semaphore_mem>>)
    %c3_i32 = arith.constant 3 : i32
    %c96_i32 = arith.constant 96 : i32
    %c0_i32_10 = arith.constant 0 : i32
    %12 = tpu.memref_slice %arg1[%c96_i32, %c0_i32_10] : memref<128x128xbf16, #tpu.memory_space<any>> -> memref<32x128xbf16, #tpu.memory_space<any>>
    %c96_i32_11 = arith.constant 96 : i32
    %c0_i32_12 = arith.constant 0 : i32
    %13 = tpu.memref_slice %arg13[%c96_i32_11, %c0_i32_12] : memref<128x128xbf16, #tpu.memory_space<vmem>> -> memref<32x128xbf16, #tpu.memory_space<vmem>>
    %14 = tpu.memref_slice %arg15[%c3_i32] : memref<4x!tpu.dma_semaphore, #tpu.memory_space<semaphore_mem>> -> memref<1x!tpu.dma_semaphore, #tpu.memory_space<semaphore_mem>>
    %15 = tpu.memref_squeeze %14 : memref<1x!tpu.dma_semaphore, #tpu.memory_space<semaphore_mem>> -> memref<!tpu.dma_semaphore, #tpu.memory_space<semaphore_mem>>
    tpu.enqueue_dma source(%12 : memref<32x128xbf16, #tpu.memory_space<any>>) target(%13 : memref<32x128xbf16, #tpu.memory_space<vmem>>) target_semaphore(%15 : memref<!tpu.dma_semaphore, #tpu.memory_space<semaphore_mem>>)
    %c0 = arith.constant 0 : index
    %c0_13 = arith.constant 0 : index
    %16 = vector.load %arg0[%c0, %c0_13] : memref<128x16xbf16, #tpu.memory_space<vmem>>, vector<128x16xbf16>
    %c0_14 = arith.constant 0 : index
    %c0_15 = arith.constant 0 : index
    %17 = vector.load %arg4[%c0_14, %c0_15] : memref<16x192xbf16, #tpu.memory_space<vmem>>, vector<16x192xbf16>
    %cst = arith.constant dense<0.000000e+00> : vector<128x192xf32>
    %18 = tpu.matmul %16, %17, %cst {dimension_numbers = #tpu.dot_dimension_numbers<[1], [0], [0], [1], [0, 0, 1, 1], [], []>} : vector<128x16xbf16>, vector<16x192xbf16>, vector<128x192xf32> -> vector<128x192xf32>
    %19 = vector.extract_strided_slice %18 {offsets = [0, 0], sizes = [128, 128], strides = [1, 1]} : vector<128x192xf32> to vector<128x128xf32>
    %20 = arith.truncf %19 : vector<128x128xf32> to vector<128x128xbf16>
    %c0_16 = arith.constant 0 : index
    %c0_17 = arith.constant 0 : index
    %21 = vector.load %arg3[%c0_16, %c0_17] : memref<1x128xf32, #tpu.memory_space<vmem>>, vector<1x128xf32>
    %c0_i32_18 = arith.constant 0 : i32
    %c0_i32_19 = arith.constant 0 : i32
    %c0_i32_20 = arith.constant 0 : i32
    %22 = tpu.memref_slice %arg1[%c0_i32_19, %c0_i32_20] : memref<128x128xbf16, #tpu.memory_space<any>> -> memref<32x128xbf16, #tpu.memory_space<any>>
    %c0_i32_21 = arith.constant 0 : i32
    %c0_i32_22 = arith.constant 0 : i32
    %23 = tpu.memref_slice %arg13[%c0_i32_21, %c0_i32_22] : memref<128x128xbf16, #tpu.memory_space<vmem>> -> memref<32x128xbf16, #tpu.memory_space<vmem>>
    %24 = tpu.memref_slice %arg15[%c0_i32_18] : memref<4x!tpu.dma_semaphore, #tpu.memory_space<semaphore_mem>> -> memref<1x!tpu.dma_semaphore, #tpu.memory_space<semaphore_mem>>
    %25 = tpu.memref_squeeze %24 : memref<1x!tpu.dma_semaphore, #tpu.memory_space<semaphore_mem>> -> memref<!tpu.dma_semaphore, #tpu.memory_space<semaphore_mem>>
    tpu.wait_dma2 semaphore(%25 : memref<!tpu.dma_semaphore, #tpu.memory_space<semaphore_mem>>) src(%22 : memref<32x128xbf16, #tpu.memory_space<any>>) dst(%23 : memref<32x128xbf16, #tpu.memory_space<vmem>>)
    %c0_23 = arith.constant 0 : index
    %c0_24 = arith.constant 0 : index
    %26 = vector.load %arg13[%c0_23, %c0_24] : memref<128x128xbf16, #tpu.memory_space<vmem>>, vector<32x128xbf16>
    %27 = arith.extf %26 : vector<32x128xbf16> to vector<32x128xf32>
    %c0_25 = arith.constant 0 : index
    %c0_26 = arith.constant 0 : index
    %28 = vector.load %arg2[%c0_25, %c0_26] : memref<128x1xf32, #tpu.memory_space<vmem>>, vector<32x1xf32>
    %29 = vector.broadcast %28 : vector<32x1xf32> to vector<32x128xf32>
    %30 = vector.broadcast %21 : vector<1x128xf32> to vector<32x128xf32>
    %31 = arith.mulf %29, %30 : vector<32x128xf32>
    %32 = arith.mulf %27, %31 : vector<32x128xf32>
    %33 = arith.truncf %32 : vector<32x128xf32> to vector<32x128xbf16>
    %c0_27 = arith.constant 0 : index
    %c0_28 = arith.constant 0 : index
    %34 = vector.load %arg13[%c0_27, %c0_28] : memref<128x128xbf16, #tpu.memory_space<vmem>>, vector<32x128xbf16>
    tpu.vector_store %arg13[%c0_27, %c0_28], %33 {strides = array<i32>} : memref<128x128xbf16, #tpu.memory_space<vmem>>, vector<32x128xbf16>,
    %cst_29 = arith.constant dense<0.000000e+00> : vector<32x128xf32>
    %35 = tpu.matmul %33, %20, %cst_29 {dimension_numbers = #tpu.dot_dimension_numbers<[1], [0], [0], [1], [0, 0, 1, 1], [], []>} : vector<32x128xbf16>, vector<128x128xbf16>, vector<32x128xf32> -> vector<32x128xf32>
    %c0_30 = arith.constant 0 : index
    %c0_31 = arith.constant 0 : index
    %36 = vector.load %arg14[%c0_30, %c0_31] : memref<128x128xf32, #tpu.memory_space<vmem>>, vector<32x128xf32>
    tpu.vector_store %arg14[%c0_30, %c0_31], %35 {strides = array<i32>} : memref<128x128xf32, #tpu.memory_space<vmem>>, vector<32x128xf32>,
    %c1_i32_32 = arith.constant 1 : i32
    %c32_i32_33 = arith.constant 32 : i32
    %c0_i32_34 = arith.constant 0 : i32
    %37 = tpu.memref_slice %arg1[%c32_i32_33, %c0_i32_34] : memref<128x128xbf16, #tpu.memory_space<any>> -> memref<32x128xbf16, #tpu.memory_space<any>>
    %c32_i32_35 = arith.constant 32 : i32
    %c0_i32_36 = arith.constant 0 : i32
    %38 = tpu.memref_slice %arg13[%c32_i32_35, %c0_i32_36] : memref<128x128xbf16, #tpu.memory_space<vmem>> -> memref<32x128xbf16, #tpu.memory_space<vmem>>
    %39 = tpu.memref_slice %arg15[%c1_i32_32] : memref<4x!tpu.dma_semaphore, #tpu.memory_space<semaphore_mem>> -> memref<1x!tpu.dma_semaphore, #tpu.memory_space<semaphore_mem>>
    %40 = tpu.memref_squeeze %39 : memref<1x!tpu.dma_semaphore, #tpu.memory_space<semaphore_mem>> -> memref<!tpu.dma_semaphore, #tpu.memory_space<semaphore_mem>>
    tpu.wait_dma2 semaphore(%40 : memref<!tpu.dma_semaphore, #tpu.memory_space<semaphore_mem>>) src(%37 : memref<32x128xbf16, #tpu.memory_space<any>>) dst(%38 : memref<32x128xbf16, #tpu.memory_space<vmem>>)
    %c32 = arith.constant 32 : index
    %c0_37 = arith.constant 0 : index
    %41 = vector.load %arg13[%c32, %c0_37] : memref<128x128xbf16, #tpu.memory_space<vmem>>, vector<32x128xbf16>
    %42 = arith.extf %41 : vector<32x128xbf16> to vector<32x128xf32>
    %c32_38 = arith.constant 32 : index
    %c0_39 = arith.constant 0 : index
    %43 = vector.load %arg2[%c32_38, %c0_39] : memref<128x1xf32, #tpu.memory_space<vmem>>, vector<32x1xf32>
    %44 = vector.broadcast %43 : vector<32x1xf32> to vector<32x128xf32>
    %45 = vector.broadcast %21 : vector<1x128xf32> to vector<32x128xf32>
    %46 = arith.mulf %44, %45 : vector<32x128xf32>
    %47 = arith.mulf %42, %46 : vector<32x128xf32>
    %48 = arith.truncf %47 : vector<32x128xf32> to vector<32x128xbf16>
    %c32_40 = arith.constant 32 : index
    %c0_41 = arith.constant 0 : index
    %49 = vector.load %arg13[%c32_40, %c0_41] : memref<128x128xbf16, #tpu.memory_space<vmem>>, vector<32x128xbf16>
    tpu.vector_store %arg13[%c32_40, %c0_41], %48 {strides = array<i32>} : memref<128x128xbf16, #tpu.memory_space<vmem>>, vector<32x128xbf16>,
    %cst_42 = arith.constant dense<0.000000e+00> : vector<32x128xf32>
    %50 = tpu.matmul %48, %20, %cst_42 {dimension_numbers = #tpu.dot_dimension_numbers<[1], [0], [0], [1], [0, 0, 1, 1], [], []>} : vector<32x128xbf16>, vector<128x128xbf16>, vector<32x128xf32> -> vector<32x128xf32>
    %c32_43 = arith.constant 32 : index
    %c0_44 = arith.constant 0 : index
    %51 = vector.load %arg14[%c32_43, %c0_44] : memref<128x128xf32, #tpu.memory_space<vmem>>, vector<32x128xf32>
    tpu.vector_store %arg14[%c32_43, %c0_44], %50 {strides = array<i32>} : memref<128x128xf32, #tpu.memory_space<vmem>>, vector<32x128xf32>,
    %c2_i32_45 = arith.constant 2 : i32
    %c64_i32_46 = arith.constant 64 : i32
    %c0_i32_47 = arith.constant 0 : i32
    %52 = tpu.memref_slice %arg1[%c64_i32_46, %c0_i32_47] : memref<128x128xbf16, #tpu.memory_space<any>> -> memref<32x128xbf16, #tpu.memory_space<any>>
    %c64_i32_48 = arith.constant 64 : i32
    %c0_i32_49 = arith.constant 0 : i32
    %53 = tpu.memref_slice %arg13[%c64_i32_48, %c0_i32_49] : memref<128x128xbf16, #tpu.memory_space<vmem>> -> memref<32x128xbf16, #tpu.memory_space<vmem>>
    %54 = tpu.memref_slice %arg15[%c2_i32_45] : memref<4x!tpu.dma_semaphore, #tpu.memory_space<semaphore_mem>> -> memref<1x!tpu.dma_semaphore, #tpu.memory_space<semaphore_mem>>
    %55 = tpu.memref_squeeze %54 : memref<1x!tpu.dma_semaphore, #tpu.memory_space<semaphore_mem>> -> memref<!tpu.dma_semaphore, #tpu.memory_space<semaphore_mem>>
    tpu.wait_dma2 semaphore(%55 : memref<!tpu.dma_semaphore, #tpu.memory_space<semaphore_mem>>) src(%52 : memref<32x128xbf16, #tpu.memory_space<any>>) dst(%53 : memref<32x128xbf16, #tpu.memory_space<vmem>>)
    %c64 = arith.constant 64 : index
    %c0_50 = arith.constant 0 : index
    %56 = vector.load %arg13[%c64, %c0_50] : memref<128x128xbf16, #tpu.memory_space<vmem>>, vector<32x128xbf16>
    %57 = arith.extf %56 : vector<32x128xbf16> to vector<32x128xf32>
    %c64_51 = arith.constant 64 : index
    %c0_52 = arith.constant 0 : index
    %58 = vector.load %arg2[%c64_51, %c0_52] : memref<128x1xf32, #tpu.memory_space<vmem>>, vector<32x1xf32>
    %59 = vector.broadcast %58 : vector<32x1xf32> to vector<32x128xf32>
    %60 = vector.broadcast %21 : vector<1x128xf32> to vector<32x128xf32>
    %61 = arith.mulf %59, %60 : vector<32x128xf32>
    %62 = arith.mulf %57, %61 : vector<32x128xf32>
    %63 = arith.truncf %62 : vector<32x128xf32> to vector<32x128xbf16>
    %c64_53 = arith.constant 64 : index
    %c0_54 = arith.constant 0 : index
    %64 = vector.load %arg13[%c64_53, %c0_54] : memref<128x128xbf16, #tpu.memory_space<vmem>>, vector<32x128xbf16>
    tpu.vector_store %arg13[%c64_53, %c0_54], %63 {strides = array<i32>} : memref<128x128xbf16, #tpu.memory_space<vmem>>, vector<32x128xbf16>,
    %cst_55 = arith.constant dense<0.000000e+00> : vector<32x128xf32>
    %65 = tpu.matmul %63, %20, %cst_55 {dimension_numbers = #tpu.dot_dimension_numbers<[1], [0], [0], [1], [0, 0, 1, 1], [], []>} : vector<32x128xbf16>, vector<128x128xbf16>, vector<32x128xf32> -> vector<32x128xf32>
    %c64_56 = arith.constant 64 : index
    %c0_57 = arith.constant 0 : index
    %66 = vector.load %arg14[%c64_56, %c0_57] : memref<128x128xf32, #tpu.memory_space<vmem>>, vector<32x128xf32>
    tpu.vector_store %arg14[%c64_56, %c0_57], %65 {strides = array<i32>} : memref<128x128xf32, #tpu.memory_space<vmem>>, vector<32x128xf32>,
    %c3_i32_58 = arith.constant 3 : i32
    %c96_i32_59 = arith.constant 96 : i32
    %c0_i32_60 = arith.constant 0 : i32
    %67 = tpu.memref_slice %arg1[%c96_i32_59, %c0_i32_60] : memref<128x128xbf16, #tpu.memory_space<any>> -> memref<32x128xbf16, #tpu.memory_space<any>>
    %c96_i32_61 = arith.constant 96 : i32
    %c0_i32_62 = arith.constant 0 : i32
    %68 = tpu.memref_slice %arg13[%c96_i32_61, %c0_i32_62] : memref<128x128xbf16, #tpu.memory_space<vmem>> -> memref<32x128xbf16, #tpu.memory_space<vmem>>
    %69 = tpu.memref_slice %arg15[%c3_i32_58] : memref<4x!tpu.dma_semaphore, #tpu.memory_space<semaphore_mem>> -> memref<1x!tpu.dma_semaphore, #tpu.memory_space<semaphore_mem>>
    %70 = tpu.memref_squeeze %69 : memref<1x!tpu.dma_semaphore, #tpu.memory_space<semaphore_mem>> -> memref<!tpu.dma_semaphore, #tpu.memory_space<semaphore_mem>>
    tpu.wait_dma2 semaphore(%70 : memref<!tpu.dma_semaphore, #tpu.memory_space<semaphore_mem>>) src(%67 : memref<32x128xbf16, #tpu.memory_space<any>>) dst(%68 : memref<32x128xbf16, #tpu.memory_space<vmem>>)
    %c96 = arith.constant 96 : index
    %c0_63 = arith.constant 0 : index
    %71 = vector.load %arg13[%c96, %c0_63] : memref<128x128xbf16, #tpu.memory_space<vmem>>, vector<32x128xbf16>
    %72 = arith.extf %71 : vector<32x128xbf16> to vector<32x128xf32>
    %c96_64 = arith.constant 96 : index
    %c0_65 = arith.constant 0 : index
    %73 = vector.load %arg2[%c96_64, %c0_65] : memref<128x1xf32, #tpu.memory_space<vmem>>, vector<32x1xf32>
    %74 = vector.broadcast %73 : vector<32x1xf32> to vector<32x128xf32>
    %75 = vector.broadcast %21 : vector<1x128xf32> to vector<32x128xf32>
    %76 = arith.mulf %74, %75 : vector<32x128xf32>
    %77 = arith.mulf %72, %76 : vector<32x128xf32>
    %78 = arith.truncf %77 : vector<32x128xf32> to vector<32x128xbf16>
    %c96_66 = arith.constant 96 : index
    %c0_67 = arith.constant 0 : index
    %79 = vector.load %arg13[%c96_66, %c0_67] : memref<128x128xbf16, #tpu.memory_space<vmem>>, vector<32x128xbf16>
    tpu.vector_store %arg13[%c96_66, %c0_67], %78 {strides = array<i32>} : memref<128x128xbf16, #tpu.memory_space<vmem>>, vector<32x128xbf16>,
    %cst_68 = arith.constant dense<0.000000e+00> : vector<32x128xf32>
    %80 = tpu.matmul %78, %20, %cst_68 {dimension_numbers = #tpu.dot_dimension_numbers<[1], [0], [0], [1], [0, 0, 1, 1], [], []>} : vector<32x128xbf16>, vector<128x128xbf16>, vector<32x128xf32> -> vector<32x128xf32>
    %c96_69 = arith.constant 96 : index
    %c0_70 = arith.constant 0 : index
    %81 = vector.load %arg14[%c96_69, %c0_70] : memref<128x128xf32, #tpu.memory_space<vmem>>, vector<32x128xf32>
    tpu.vector_store %arg14[%c96_69, %c0_70], %80 {strides = array<i32>} : memref<128x128xf32, #tpu.memory_space<vmem>>, vector<32x128xf32>,
    %c0_71 = arith.constant 0 : index
    %c0_72 = arith.constant 0 : index
    %82 = vector.load %arg13[%c0_71, %c0_72] : memref<128x128xbf16, #tpu.memory_space<vmem>>, vector<128x128xbf16>
    %c0_73 = arith.constant 0 : index
    %c0_74 = arith.constant 0 : index
    %83 = vector.load %arg14[%c0_73, %c0_74] : memref<128x128xf32, #tpu.memory_space<vmem>>, vector<128x128xf32>
    %84 = vector.extract_strided_slice %83 {offsets = [0, 0], sizes = [128, 64], strides = [1, 1]} : vector<128x128xf32> to vector<128x64xf32>
    %85 = arith.truncf %84 : vector<128x64xf32> to vector<128x64xbf16>
    %cst_75 = arith.constant dense<0.000000e+00> : vector<128x64xf32>
    %86 = tpu.matmul %82, %85, %cst_75 {dimension_numbers = #tpu.dot_dimension_numbers<[1], [0], [0], [1], [0, 0, 1, 1], [], []>} : vector<128x128xbf16>, vector<128x64xbf16>, vector<128x64xf32> -> vector<128x64xf32>
    %87 = vector.extract_strided_slice %83 {offsets = [0, 64], sizes = [128, 64], strides = [1, 1]} : vector<128x128xf32> to vector<128x64xf32>
    %88 = vector.extract_strided_slice %18 {offsets = [0, 128], sizes = [128, 64], strides = [1, 1]} : vector<128x192xf32> to vector<128x64xf32>
    %89 = tpu.concatenate %86, %87, %88 in 1 : vector<128x64xf32>, vector<128x64xf32>, vector<128x64xf32> -> vector<128x192xf32>
    %c0_76 = arith.constant 0 : index
    %c0_77 = arith.constant 0 : index
    %90 = vector.load %arg5[%c0_76, %c0_77] : memref<1x192xf32, #tpu.memory_space<vmem>>, vector<1x192xf32>
    %91 = vector.broadcast %90 : vector<1x192xf32> to vector<128x192xf32>
    %92 = arith.addf %89, %91 : vector<128x192xf32>
    %93 = arith.truncf %92 : vector<128x192xf32> to vector<128x192xbf16>
    %c0_78 = arith.constant 0 : index
    %c0_79 = arith.constant 0 : index
    %94 = vector.load %arg6[%c0_78, %c0_79] : memref<192x192xbf16, #tpu.memory_space<vmem>>, vector<192x192xbf16>
    %cst_80 = arith.constant dense<0.000000e+00> : vector<128x192xf32>
    %95 = tpu.matmul %93, %94, %cst_80 {dimension_numbers = #tpu.dot_dimension_numbers<[1], [0], [0], [1], [0, 0, 1, 1], [], []>} : vector<128x192xbf16>, vector<192x192xbf16>, vector<128x192xf32> -> vector<128x192xf32>
    %96 = vector.extract_strided_slice %95 {offsets = [0, 0], sizes = [128, 128], strides = [1, 1]} : vector<128x192xf32> to vector<128x128xf32>
    %97 = arith.truncf %96 : vector<128x128xf32> to vector<128x128xbf16>
    %cst_81 = arith.constant dense<0.000000e+00> : vector<128x128xf32>
    %98 = tpu.matmul %82, %97, %cst_81 {dimension_numbers = #tpu.dot_dimension_numbers<[1], [0], [0], [1], [0, 0, 1, 1], [], []>} : vector<128x128xbf16>, vector<128x128xbf16>, vector<128x128xf32> -> vector<128x128xf32>
    %99 = vector.extract_strided_slice %98 {offsets = [0, 0], sizes = [128, 64], strides = [1, 1]} : vector<128x128xf32> to vector<128x64xf32>
    %100 = arith.truncf %99 : vector<128x64xf32> to vector<128x64xbf16>
    %cst_82 = arith.constant dense<0.000000e+00> : vector<128x64xf32>
    %101 = tpu.matmul %82, %100, %cst_82 {dimension_numbers = #tpu.dot_dimension_numbers<[1], [0], [0], [1], [0, 0, 1, 1], [], []>} : vector<128x128xbf16>, vector<128x64xbf16>, vector<128x64xf32> -> vector<128x64xf32>
    %102 = vector.extract_strided_slice %98 {offsets = [0, 64], sizes = [128, 64], strides = [1, 1]} : vector<128x128xf32> to vector<128x64xf32>
    %103 = vector.extract_strided_slice %95 {offsets = [0, 128], sizes = [128, 64], strides = [1, 1]} : vector<128x192xf32> to vector<128x64xf32>
    %104 = tpu.concatenate %101, %102, %103 in 1 : vector<128x64xf32>, vector<128x64xf32>, vector<128x64xf32> -> vector<128x192xf32>
    %c0_83 = arith.constant 0 : index
    %c0_84 = arith.constant 0 : index
    %105 = vector.load %arg7[%c0_83, %c0_84] : memref<1x192xf32, #tpu.memory_space<vmem>>, vector<1x192xf32>
    %106 = vector.broadcast %105 : vector<1x192xf32> to vector<128x192xf32>
    %107 = arith.addf %104, %106 : vector<128x192xf32>
    %108 = arith.truncf %107 : vector<128x192xf32> to vector<128x192xbf16>
    %c0_85 = arith.constant 0 : index
    %c0_86 = arith.constant 0 : index
    %109 = vector.load %arg8[%c0_85, %c0_86] : memref<192x192xbf16, #tpu.memory_space<vmem>>, vector<192x192xbf16>
    %cst_87 = arith.constant dense<0.000000e+00> : vector<128x192xf32>
    %110 = tpu.matmul %108, %109, %cst_87 {dimension_numbers = #tpu.dot_dimension_numbers<[1], [0], [0], [1], [0, 0, 1, 1], [], []>} : vector<128x192xbf16>, vector<192x192xbf16>, vector<128x192xf32> -> vector<128x192xf32>
    %111 = vector.extract_strided_slice %110 {offsets = [0, 0], sizes = [128, 128], strides = [1, 1]} : vector<128x192xf32> to vector<128x128xf32>
    %112 = arith.truncf %111 : vector<128x128xf32> to vector<128x128xbf16>
    %cst_88 = arith.constant dense<0.000000e+00> : vector<128x128xf32>
    %113 = tpu.matmul %82, %112, %cst_88 {dimension_numbers = #tpu.dot_dimension_numbers<[1], [0], [0], [1], [0, 0, 1, 1], [], []>} : vector<128x128xbf16>, vector<128x128xbf16>, vector<128x128xf32> -> vector<128x128xf32>
    %114 = vector.extract_strided_slice %113 {offsets = [0, 0], sizes = [128, 64], strides = [1, 1]} : vector<128x128xf32> to vector<128x64xf32>
    %115 = arith.truncf %114 : vector<128x64xf32> to vector<128x64xbf16>
    %cst_89 = arith.constant dense<0.000000e+00> : vector<128x64xf32>
    %116 = tpu.matmul %82, %115, %cst_89 {dimension_numbers = #tpu.dot_dimension_numbers<[1], [0], [0], [1], [0, 0, 1, 1], [], []>} : vector<128x128xbf16>, vector<128x64xbf16>, vector<128x64xf32> -> vector<128x64xf32>
    %117 = vector.extract_strided_slice %113 {offsets = [0, 64], sizes = [128, 64], strides = [1, 1]} : vector<128x128xf32> to vector<128x64xf32>
    %118 = vector.extract_strided_slice %110 {offsets = [0, 128], sizes = [128, 64], strides = [1, 1]} : vector<128x192xf32> to vector<128x64xf32>
    %119 = tpu.concatenate %116, %117, %118 in 1 : vector<128x64xf32>, vector<128x64xf32>, vector<128x64xf32> -> vector<128x192xf32>
    %c0_90 = arith.constant 0 : index
    %c0_91 = arith.constant 0 : index
    %120 = vector.load %arg9[%c0_90, %c0_91] : memref<1x192xf32, #tpu.memory_space<vmem>>, vector<1x192xf32>
    %121 = vector.broadcast %120 : vector<1x192xf32> to vector<128x192xf32>
    %122 = arith.addf %119, %121 : vector<128x192xf32>
    %c0_92 = arith.constant 0 : index
    %c0_93 = arith.constant 0 : index
    %123 = vector.load %arg10[%c0_92, %c0_93] : memref<192x128xf32, #tpu.memory_space<vmem>>, vector<192x128xf32>
    %cst_94 = arith.constant dense<0.000000e+00> : vector<128x128xf32>
    %124 = tpu.matmul %122, %123, %cst_94 {dimension_numbers = #tpu.dot_dimension_numbers<[1], [0], [0], [1], [0, 0, 1, 1], [], []>} : vector<128x192xf32>, vector<192x128xf32>, vector<128x128xf32> -> vector<128x128xf32>
    %c0_95 = arith.constant 0 : index
    %c0_96 = arith.constant 0 : index
    %125 = vector.load %arg11[%c0_95, %c0_96] : memref<1x128xf32, #tpu.memory_space<vmem>>, vector<1x128xf32>
    %126 = vector.broadcast %125 : vector<1x128xf32> to vector<128x128xf32>
    %127 = arith.addf %124, %126 : vector<128x128xf32>
    %c0_97 = arith.constant 0 : index
    %c0_98 = arith.constant 0 : index
    %128 = vector.load %arg12[%c0_97, %c0_98] : memref<128x128xf32, #tpu.memory_space<vmem>>, vector<128x128xf32>
    tpu.vector_store %arg12[%c0_97, %c0_98], %127 {strides = array<i32>} : memref<128x128xf32, #tpu.memory_space<vmem>>, vector<128x128xf32>,
    return
  }
}

</mosaic_0001>

<llo_original>
// kernel: mixhop_forward.1
$region0: #{mixhop_forward.1}
  #allocation0 [shape = 'u32[]', space=smem, size = 0x4, offset = 0x4, fixed_abs, tag = 'smem constant byte address 0x4 - core index']
  #allocation1 [shape = 'u32[72,128]{1,0:T(1,128)}', space=vmem, size = 0x9000, scoped, tag = 'internal scratch']
  #allocation2 [shape = 'bf16[128,128]{1,0:T(8,128)(2,1)}', space=vmem, size = 0x8000, scoped, tag = 'scratch operand']
  #allocation3 [shape = 'f32[128,128]{1,0:T(8,128)}', space=vmem, size = 0x10000, scoped, tag = 'scratch operand']
  #allocation4 [shape = 's32[4]{0}', space=sflag, size = 0x10, scoped, tag = 'scratch operand']
  #allocation5 [shape = 's32[]', space=sflag, size = 0x4, offset = 0, fixed_abs, tag = 'sflag constant byte address 0x0 - dummy sync flag']
  #allocation6 [shape = 's32[]', space=sflag, size = 0x4, offset = 0, fixed_abs, tag = 'sflag constant byte address 0x0 - dummy sync flag']
  #allocation7 [shape = 's32[]', space=sflag, size = 0x4, offset = 0, fixed_abs, tag = 'sflag constant byte address 0x0 - dummy sync flag']
  #allocation8 [shape = 's32[]', space=sflag, size = 0x4, offset = 0, fixed_abs, tag = 'sflag constant byte address 0x0 - dummy sync flag']
  %s0 = inlined_call_operand.vmem [shape: bf16[128,16], index: 0, kind: input, shape index: {}]
  %s1 = inlined_call_operand.vmem [shape: bf16[128,128], index: 1, kind: input, shape index: {}]
  %s2 = inlined_call_operand.vmem [shape: f32[128,1], index: 2, kind: input, shape index: {}]
  %s3 = inlined_call_operand.vmem [shape: f32[1,128], index: 3, kind: input, shape index: {}]
  %s4 = inlined_call_operand.vmem [shape: bf16[16,192], index: 4, kind: input, shape index: {}]
  %s5 = inlined_call_operand.vmem [shape: f32[1,192], index: 5, kind: input, shape index: {}]
  %s6 = inlined_call_operand.vmem [shape: bf16[192,192], index: 6, kind: input, shape index: {}]
  %s7 = inlined_call_operand.vmem [shape: f32[1,192], index: 7, kind: input, shape index: {}]
  %s8 = inlined_call_operand.vmem [shape: bf16[192,192], index: 8, kind: input, shape index: {}]
  %s9 = inlined_call_operand.vmem [shape: f32[1,192], index: 9, kind: input, shape index: {}]
  %s10 = inlined_call_operand.vmem [shape: f32[192,128], index: 10, kind: input, shape index: {}]
  %s11 = inlined_call_operand.vmem [shape: f32[1,128], index: 11, kind: input, shape index: {}]
  %s12 = inlined_call_operand.vmem [shape: f32[128,128], index: 12, kind: output, shape index: {}]
  %s13 = sld [smem:[#allocation0]]
  $region130: #{mixhop_forward.1} parent=0
    _
  %s15 = ssub.s32 1, %s13
  %s16 = scalar_select 0, %s15, %s13
  // Predicated region
  $region2: #{mixhop_forward.1} parent=0 // pred_check
    _
  $region3: #{mixhop_forward.1} parent=0 // pred_check_branch
    %18 = sbr.rel (0) target = $region5
  $region4: #{mixhop_forward.1} parent=0 // pred_region
    _
  $region5: #{mixhop_forward.1} parent=0 // pred_fallthru
    _
  // Predicated region
  $region6: #{mixhop_forward.1} parent=0 // pred_check
    _
  $region7: #{mixhop_forward.1} parent=0 // pred_check_branch
    %20 = sbr.rel (0) target = $region9
  $region8: #{mixhop_forward.1} parent=0 // pred_region
    _
  $region9: #{mixhop_forward.1} parent=0 // pred_fallthru
    _
  // Predicated region
  $region10: #{mixhop_forward.1} parent=0 // pred_check
    _
  $region11: #{mixhop_forward.1} parent=0 // pred_check_branch
    %22 = sbr.rel (0) target = $region13
  $region12: #{mixhop_forward.1} parent=0 // pred_region
    _
  $region13: #{mixhop_forward.1} parent=0 // pred_fallthru
    _
  // Predicated region
  $region14: #{mixhop_forward.1} parent=0 // pred_check
    _
  $region15: #{mixhop_forward.1} parent=0 // pred_check_branch
    %24 = sbr.rel (0) target = $region17
  $region16: #{mixhop_forward.1} parent=0 // pred_region
    _
  $region17: #{mixhop_forward.1} parent=0 // pred_fallthru
    _
  // Predicated region
  $region18: #{mixhop_forward.1} parent=0 // pred_check
    _
  $region19: #{mixhop_forward.1} parent=0 // pred_check_branch
    %26 = sbr.rel (0) target = $region21
  $region20: #{mixhop_forward.1} parent=0 // pred_region
    _
  $region21: #{mixhop_forward.1} parent=0 // pred_fallthru
    _
  // Predicated region
  $region22: #{mixhop_forward.1} parent=0 // pred_check
    _
  $region23: #{mixhop_forward.1} parent=0 // pred_check_branch
    %28 = sbr.rel (0) target = $region25
  $region24: #{mixhop_forward.1} parent=0 // pred_region
    _
  $region25: #{mixhop_forward.1} parent=0 // pred_fallthru
    _
  // Predicated region
  $region26: #{mixhop_forward.1} parent=0 // pred_check
    _
  $region27: #{mixhop_forward.1} parent=0 // pred_check_branch
    %30 = sbr.rel (0) target = $region29
  $region28: #{mixhop_forward.1} parent=0 // pred_region
    _
  $region29: #{mixhop_forward.1} parent=0 // pred_fallthru
    _
  // Predicated region
  $region30: #{mixhop_forward.1} parent=0 // pred_check
    _
  $region31: #{mixhop_forward.1} parent=0 // pred_check_branch
    %32 = sbr.rel (0) target = $region33
  $region32: #{mixhop_forward.1} parent=0 // pred_region
    _
  $region33: #{mixhop_forward.1} parent=0 // pred_fallthru
    _
  // Predicated region
  $region34: #{mixhop_forward.1} parent=0 // pred_check
    _
  $region35: #{mixhop_forward.1} parent=0 // pred_check_branch
    %34 = sbr.rel (0) target = $region37
  $region36: #{mixhop_forward.1} parent=0 // pred_region
    _
  $region37: #{mixhop_forward.1} parent=0 // pred_fallthru
    _
  // Predicated region
  $region38: #{mixhop_forward.1} parent=0 // pred_check
    _
  $region39: #{mixhop_forward.1} parent=0 // pred_check_branch
    %36 = sbr.rel (0) target = $region41
  $region40: #{mixhop_forward.1} parent=0 // pred_region
    _
  $region41: #{mixhop_forward.1} parent=0 // pred_fallthru
    _
  // Predicated region
  $region42: #{mixhop_forward.1} parent=0 // pred_check
    _
  $region43: #{mixhop_forward.1} parent=0 // pred_check_branch
    %38 = sbr.rel (0) target = $region45
  $region44: #{mixhop_forward.1} parent=0 // pred_region
    _
  $region45: #{mixhop_forward.1} parent=0 // pred_fallthru
    _
  // Predicated region
  $region46: #{mixhop_forward.1} parent=0 // pred_check
    _
  $region47: #{mixhop_forward.1} parent=0 // pred_check_branch
    %41 = sbr.rel (0) target = $region49
  $region48: #{mixhop_forward.1} parent=0 // pred_region
    loop: start=0, step=1, limit=1
    $region50: #{mixhop_forward.1} parent=48 // loop_pre_header
      _
    $region51: #{mixhop_forward.1} parent=48 // loop_header
      %s43 = sphi 0, %s47
      %p44 = scmp.ge.s32.totalorder %s43, 1
      %s48 = sphi %s1, %s1
      %s49 = sphi [#allocation2], [#allocation2]
    $region52: #{mixhop_forward.1} parent=48 // loop_header_branch
      %46 = sbr.rel (%p44) target = $region56
    $region53: #{mixhop_forward.1} parent=48 // loop_body
      %v50 = vld [vmem:[%s48] sm:$0xff]
      %51 = vst [vmem:[%s49] sm:$0xff] %v50
      %v52 = vld [vmem:[%s48 + $0x8] sm:$0xff]
      %53 = vst [vmem:[%s49 + $0x8] sm:$0xff] %v52
    $region54: #{mixhop_forward.1} parent=48 // loop_footer
      %s47 = sadd.s32 1, %s43
    $region55: #{mixhop_forward.1} parent=48 // loop_footer_branch
      %42 = sbr.rel target = $region51
    $region56: #{mixhop_forward.1} parent=48 // loop_exit
      _
  $region49: #{mixhop_forward.1} parent=0 // pred_fallthru
    _
  // Predicated region
  $region57: #{mixhop_forward.1} parent=0 // pred_check
    _
  $region58: #{mixhop_forward.1} parent=0 // pred_check_branch
    %55 = sbr.rel target = $region60
  $region59: #{mixhop_forward.1} parent=0 // pred_region
    _
  $region60: #{mixhop_forward.1} parent=0 // pred_fallthru
    _
  // Predicated region
  $region61: #{mixhop_forward.1} parent=0 // pred_check
    _
  $region62: #{mixhop_forward.1} parent=0 // pred_check_branch
    %58 = sbr.rel (0) target = $region64
  $region63: #{mixhop_forward.1} parent=0 // pred_region
    %59 = vsyncadd [#allocation4], 256
  $region64: #{mixhop_forward.1} parent=0 // pred_fallthru
    _
  %s60 = scalar_lea.vmem %s1, 16
  %s61 = scalar_lea.vmem [#allocation2], 16
  %s62 = scalar_lea.sflag [#allocation4], 1
  // Predicated region
  $region65: #{mixhop_forward.1} parent=0 // pred_check
    _
  $region66: #{mixhop_forward.1} parent=0 // pred_check_branch
    %64 = sbr.rel (0) target = $region68
  $region67: #{mixhop_forward.1} parent=0 // pred_region
    loop: start=0, step=1, limit=1
    $region69: #{mixhop_forward.1} parent=67 // loop_pre_header
      _
    $region70: #{mixhop_forward.1} parent=67 // loop_header
      %s66 = sphi 0, %s70
      %p67 = scmp.ge.s32.totalorder %s66, 1
      %s71 = sphi %s60, %s60
      %s72 = sphi %s61, %s61
    $region71: #{mixhop_forward.1} parent=67 // loop_header_branch
      %69 = sbr.rel (%p67) target = $region75
    $region72: #{mixhop_forward.1} parent=67 // loop_body
      %v73 = vld [vmem:[%s71] sm:$0xff]
      %74 = vst [vmem:[%s72] sm:$0xff] %v73
      %v75 = vld [vmem:[%s71 + $0x8] sm:$0xff]
      %76 = vst [vmem:[%s72 + $0x8] sm:$0xff] %v75
    $region73: #{mixhop_forward.1} parent=67 // loop_footer
      %s70 = sadd.s32 1, %s66
    $region74: #{mixhop_forward.1} parent=67 // loop_footer_branch
      %65 = sbr.rel target = $region70
    $region75: #{mixhop_forward.1} parent=67 // loop_exit
      _
  $region68: #{mixhop_forward.1} parent=0 // pred_fallthru
    _
  // Predicated region
  $region76: #{mixhop_forward.1} parent=0 // pred_check
    _
  $region77: #{mixhop_forward.1} parent=0 // pred_check_branch
    %78 = sbr.rel target = $region79
  $region78: #{mixhop_forward.1} parent=0 // pred_region
    _
  $region79: #{mixhop_forward.1} parent=0 // pred_fallthru
    _
  // Predicated region
  $region80: #{mixhop_forward.1} parent=0 // pred_check
    _
  $region81: #{mixhop_forward.1} parent=0 // pred_check_branch
    %81 = sbr.rel (0) target = $region83
  $region82: #{mixhop_forward.1} parent=0 // pred_region
    %82 = vsyncadd %s62, 256
  $region83: #{mixhop_forward.1} parent=0 // pred_fallthru
    _
  %s83 = scalar_lea.vmem %s1, 32
  %s84 = scalar_lea.vmem [#allocation2], 32
  %s85 = scalar_lea.sflag [#allocation4], 2
  // Predicated region
  $region84: #{mixhop_forward.1} parent=0 // pred_check
    _
  $region85: #{mixhop_forward.1} parent=0 // pred_check_branch
    %87 = sbr.rel (0) target = $region87
  $region86: #{mixhop_forward.1} parent=0 // pred_region
    loop: start=0, step=1, limit=1
    $region88: #{mixhop_forward.1} parent=86 // loop_pre_header
      _
    $region89: #{mixhop_forward.1} parent=86 // loop_header
      %s89 = sphi 0, %s93
      %p90 = scmp.ge.s32.totalorder %s89, 1
      %s94 = sphi %s83, %s83
      %s95 = sphi %s84, %s84
    $region90: #{mixhop_forward.1} parent=86 // loop_header_branch
      %92 = sbr.rel (%p90) target = $region94
    $region91: #{mixhop_forward.1} parent=86 // loop_body
      %v96 = vld [vmem:[%s94] sm:$0xff]
      %97 = vst [vmem:[%s95] sm:$0xff] %v96
      %v98 = vld [vmem:[%s94 + $0x8] sm:$0xff]
      %99 = vst [vmem:[%s95 + $0x8] sm:$0xff] %v98
    $region92: #{mixhop_forward.1} parent=86 // loop_footer
      %s93 = sadd.s32 1, %s89
    $region93: #{mixhop_forward.1} parent=86 // loop_footer_branch
      %88 = sbr.rel target = $region89
    $region94: #{mixhop_forward.1} parent=86 // loop_exit
      _
  $region87: #{mixhop_forward.1} parent=0 // pred_fallthru
    _
  // Predicated region
  $region95: #{mixhop_forward.1} parent=0 // pred_check
    _
  $region96: #{mixhop_forward.1} parent=0 // pred_check_branch
    %101 = sbr.rel target = $region98
  $region97: #{mixhop_forward.1} parent=0 // pred_region
    _
  $region98: #{mixhop_forward.1} parent=0 // pred_fallthru
    _
  // Predicated region
  $region99: #{mixhop_forward.1} parent=0 // pred_check
    _
  $region100: #{mixhop_forward.1} parent=0 // pred_check_branch
    %104 = sbr.rel (0) target = $region102
  $region101: #{mixhop_forward.1} parent=0 // pred_region
    %105 = vsyncadd %s85, 256
  $region102: #{mixhop_forward.1} parent=0 // pred_fallthru
    _
  %s106 = scalar_lea.vmem %s1, 48
  %s107 = scalar_lea.vmem [#allocation2], 48
  %s108 = scalar_lea.sflag [#allocation4], 3
  // Predicated region
  $region103: #{mixhop_forward.1} parent=0 // pred_check
    _
  $region104: #{mixhop_forward.1} parent=0 // pred_check_branch
    %110 = sbr.rel (0) target = $region106
  $region105: #{mixhop_forward.1} parent=0 // pred_region
    loop: start=0, step=1, limit=1
    $region107: #{mixhop_forward.1} parent=105 // loop_pre_header
      _
    $region108: #{mixhop_forward.1} parent=105 // loop_header
      %s112 = sphi 0, %s116
      %p113 = scmp.ge.s32.totalorder %s112, 1
      %s117 = sphi %s106, %s106
      %s118 = sphi %s107, %s107
    $region109: #{mixhop_forward.1} parent=105 // loop_header_branch
      %115 = sbr.rel (%p113) target = $region113
    $region110: #{mixhop_forward.1} parent=105 // loop_body
      %v119 = vld [vmem:[%s117] sm:$0xff]
      %120 = vst [vmem:[%s118] sm:$0xff] %v119
      %v121 = vld [vmem:[%s117 + $0x8] sm:$0xff]
      %122 = vst [vmem:[%s118 + $0x8] sm:$0xff] %v121
    $region111: #{mixhop_forward.1} parent=105 // loop_footer
      %s116 = sadd.s32 1, %s112
    $region112: #{mixhop_forward.1} parent=105 // loop_footer_branch
      %111 = sbr.rel target = $region108
    $region113: #{mixhop_forward.1} parent=105 // loop_exit
      _
  $region106: #{mixhop_forward.1} parent=0 // pred_fallthru
    _
  // Predicated region
  $region114: #{mixhop_forward.1} parent=0 // pred_check
    _
  $region115: #{mixhop_forward.1} parent=0 // pred_check_branch
    %124 = sbr.rel target = $region117
  $region116: #{mixhop_forward.1} parent=0 // pred_region
    _
  $region117: #{mixhop_forward.1} parent=0 // pred_fallthru
    _
  // Predicated region
  $region118: #{mixhop_forward.1} parent=0 // pred_check
    _
  $region119: #{mixhop_forward.1} parent=0 // pred_check_branch
    %127 = sbr.rel (0) target = $region121
  $region120: #{mixhop_forward.1} parent=0 // pred_region
    %128 = vsyncadd %s108, 256
  $region121: #{mixhop_forward.1} parent=0 // pred_fallthru
    _
  %v129 = vld [vmem:[%s0] sm:$0xf]
  %v130 = vld [vmem:[%s0 + $0x4] sm:$0xf]
  %v131 = vld [vmem:[%s0 + $0x8] sm:$0xf]
  %v132 = vld [vmem:[%s0 + $0xc] sm:$0xf]
  %v133 = vld [vmem:[%s0 + $0x10] sm:$0xf]
  %v134 = vld [vmem:[%s0 + $0x14] sm:$0xf]
  %v135 = vld [vmem:[%s0 + $0x18] sm:$0xf]
  %v136 = vld [vmem:[%s0 + $0x1c] sm:$0xf]
  %v137 = vld [vmem:[%s0 + $0x20] sm:$0xf]
  %v138 = vld [vmem:[%s0 + $0x24] sm:$0xf]
  %v139 = vld [vmem:[%s0 + $0x28] sm:$0xf]
  %v140 = vld [vmem:[%s0 + $0x2c] sm:$0xf]
  %v141 = vld [vmem:[%s0 + $0x30] sm:$0xf]
  %v142 = vld [vmem:[%s0 + $0x34] sm:$0xf]
  %v143 = vld [vmem:[%s0 + $0x38] sm:$0xf]
  %v144 = vld [vmem:[%s0 + $0x3c] sm:$0xf]
  %v145 = vld [vmem:[%s4] sm:$0xff]
  %v146 = vld [vmem:[%s4 + $0x8] sm:$0xff]
  %v163 = vunpack.c.l.b16 %v129
  %v164 = vunpack.c.l.b16 %v130
  %v165 = vunpack.c.l.b16 %v131
  %v166 = vunpack.c.l.b16 %v132
  %v167 = vunpack.c.l.b16 %v133
  %v168 = vunpack.c.l.b16 %v134
  %v169 = vunpack.c.l.b16 %v135
  %v170 = vunpack.c.l.b16 %v136
  %v171 = vunpack.c.l.b16 %v137
  %v172 = vunpack.c.l.b16 %v138
  %v173 = vunpack.c.l.b16 %v139
  %v174 = vunpack.c.l.b16 %v140
  %v175 = vunpack.c.l.b16 %v141
  %v176 = vunpack.c.l.b16 %v142
  %v177 = vunpack.c.l.b16 %v143
  %v178 = vunpack.c.l.b16 %v144
  %v179 = vpack.c.b16 %v164, %v163
  %v180 = vpack.c.b16 %v166, %v165
  %v181 = vpack.c.b16 %v168, %v167
  %v182 = vpack.c.b16 %v170, %v169
  %v183 = vpack.c.b16 %v172, %v171
  %v184 = vpack.c.b16 %v174, %v173
  %v185 = vpack.c.b16 %v176, %v175
  %v186 = vpack.c.b16 %v178, %v177
  %v189 = vunpack.c.l.b16 %v145
  %v190 = vunpack.c.h.b16 %v145
  %v191 = vunpack.c.l.b16 %v146
  %v192 = vunpack.c.h.b16 %v146
  %v193 = vpack.c.b16 %v191, %v189
  %v194 = vpack.c.b16 %v192, %v190
  %vm197 = vcmask 130048
  %v199 = vsel %vm197, %v179, 0
  %v202 = vsel %vm197, %v180, 0
  %v205 = vsel %vm197, %v181, 0
  %v208 = vsel %vm197, %v182, 0
  %v211 = vsel %vm197, %v183, 0
  %v214 = vsel %vm197, %v184, 0
  %v217 = vsel %vm197, %v185, 0
  %v220 = vsel %vm197, %v186, 0
  %222 = vmatpush.bf16.msra.mxu0 0
  %223 = vmatpush.bf16.msra.mxu0 0
  %224 = vmatpush.bf16.msra.mxu0 0
  %225 = vmatpush.bf16.msra.mxu0 0
  %226 = vmatpush.bf16.msra.mxu0 0
  %227 = vmatpush.bf16.msra.mxu0 0
  %228 = vmatpush.bf16.msra.mxu0 0
  %229 = vmatpush.bf16.msra.mxu0 %v193
  %230 = vmatmul.bf16.gmra.mxu0 %v199
  %v231 = vpop.f32.mrf.mxu0
  %v232 = vadd.f32 0.0, %v231
  %v233 = vpop.f32.mrf.mxu0
  %v234 = vadd.f32 0.0, %v233
  %235 = vmatmul.bf16.gmra.mxu0 %v202
  %v236 = vpop.f32.mrf.mxu0
  %v237 = vadd.f32 0.0, %v236
  %v238 = vpop.f32.mrf.mxu0
  %v239 = vadd.f32 0.0, %v238
  %240 = vmatmul.bf16.gmra.mxu0 %v205
  %v241 = vpop.f32.mrf.mxu0
  %v242 = vadd.f32 0.0, %v241
  %v243 = vpop.f32.mrf.mxu0
  %v244 = vadd.f32 0.0, %v243
  %245 = vmatmul.bf16.gmra.mxu0 %v208
  %v246 = vpop.f32.mrf.mxu0
  %v247 = vadd.f32 0.0, %v246
  %v248 = vpop.f32.mrf.mxu0
  %v249 = vadd.f32 0.0, %v248
  %250 = vmatmul.bf16.gmra.mxu0 %v211
  %v251 = vpop.f32.mrf.mxu0
  %v252 = vadd.f32 0.0, %v251
  %v253 = vpop.f32.mrf.mxu0
  %v254 = vadd.f32 0.0, %v253
  %255 = vmatmul.bf16.gmra.mxu0 %v214
  %v256 = vpop.f32.mrf.mxu0
  %v257 = vadd.f32 0.0, %v256
  %v258 = vpop.f32.mrf.mxu0
  %v259 = vadd.f32 0.0, %v258
  %260 = vmatmul.bf16.gmra.mxu0 %v217
  %v261 = vpop.f32.mrf.mxu0
  %v262 = vadd.f32 0.0, %v261
  %v263 = vpop.f32.mrf.mxu0
  %v264 = vadd.f32 0.0, %v263
  %265 = vmatmul.bf16.gmra.mxu0 %v220
  %v266 = vpop.f32.mrf.mxu0
  %v267 = vadd.f32 0.0, %v266
  %v268 = vpop.f32.mrf.mxu0
  %v269 = vadd.f32 0.0, %v268
  %270 = vdwg.mxu0
  %271 = vmatpush.bf16.msra.mxu0 0
  %272 = vmatpush.bf16.msra.mxu0 0
  %273 = vmatpush.bf16.msra.mxu0 0
  %274 = vmatpush.bf16.msra.mxu0 0
  %275 = vmatpush.bf16.msra.mxu0 0
  %276 = vmatpush.bf16.msra.mxu0 0
  %277 = vmatpush.bf16.msra.mxu0 0
  %278 = vmatpush.bf16.msra.mxu0 %v194
  %279 = vmatmul.bf16.gmra.mxu0 %v199
  %v280 = vpop.f32.mrf.mxu0
  %v281 = vadd.f32 0.0, %v280
  %v282 = vpop.f32.mrf.mxu0
  %v283 = vadd.f32 0.0, %v282
  %284 = vmatmul.bf16.gmra.mxu0 %v202
  %v285 = vpop.f32.mrf.mxu0
  %v286 = vadd.f32 0.0, %v285
  %v287 = vpop.f32.mrf.mxu0
  %v288 = vadd.f32 0.0, %v287
  %289 = vmatmul.bf16.gmra.mxu0 %v205
  %v290 = vpop.f32.mrf.mxu0
  %v291 = vadd.f32 0.0, %v290
  %v292 = vpop.f32.mrf.mxu0
  %v293 = vadd.f32 0.0, %v292
  %294 = vmatmul.bf16.gmra.mxu0 %v208
  %v295 = vpop.f32.mrf.mxu0
  %v296 = vadd.f32 0.0, %v295
  %v297 = vpop.f32.mrf.mxu0
  %v298 = vadd.f32 0.0, %v297
  %299 = vmatmul.bf16.gmra.mxu0 %v211
  %v300 = vpop.f32.mrf.mxu0
  %v301 = vadd.f32 0.0, %v300
  %v302 = vpop.f32.mrf.mxu0
  %v303 = vadd.f32 0.0, %v302
  %304 = vmatmul.bf16.gmra.mxu0 %v214
  %v305 = vpop.f32.mrf.mxu0
  %v306 = vadd.f32 0.0, %v305
  %v307 = vpop.f32.mrf.mxu0
  %v308 = vadd.f32 0.0, %v307
  %309 = vmatmul.bf16.gmra.mxu0 %v217
  %v310 = vpop.f32.mrf.mxu0
  %v311 = vadd.f32 0.0, %v310
  %v312 = vpop.f32.mrf.mxu0
  %v313 = vadd.f32 0.0, %v312
  %314 = vmatmul.bf16.gmra.mxu0 %v220
  %v315 = vpop.f32.mrf.mxu0
  %v316 = vadd.f32 0.0, %v315
  %v317 = vpop.f32.mrf.mxu0
  %v318 = vadd.f32 0.0, %v317
  %319 = vdwg.mxu0
  %v320 = vpack.c.bf16 %v234, %v232
  %v321 = vpack.c.bf16 %v239, %v237
  %v322 = vpack.c.bf16 %v244, %v242
  %v323 = vpack.c.bf16 %v249, %v247
  %v324 = vpack.c.bf16 %v254, %v252
  %v325 = vpack.c.bf16 %v259, %v257
  %v326 = vpack.c.bf16 %v264, %v262
  %v327 = vpack.c.bf16 %v269, %v267
  %v328 = vld [vmem:[%s3] sm:$0x1]
  %s329 = smul.u32 4, 4
  %s330 = smul.u32 %s329, 1
  %s331 = sshll.u32 %s330, 4
  %332 = dma.done [#allocation4], %s331
  %v333 = vld [vmem:[#allocation2] sm:$0xf]
  %v334 = vld [vmem:[#allocation2 + $0x4] sm:$0xf]
  %v335 = vld [vmem:[#allocation2 + $0x8] sm:$0xf]
  %v336 = vld [vmem:[#allocation2 + $0xc] sm:$0xf]
  %v337 = vunpack.c.l.bf16 %v333
  %v338 = vunpack.c.l.bf16 %v334
  %v339 = vunpack.c.l.bf16 %v335
  %v340 = vunpack.c.l.bf16 %v336
  %v341 = vld [vmem:[%s2] sm:$0xff]
  %v342 = vld [vmem:[%s2 + $0x8] sm:$0xff]
  %v343 = vld [vmem:[%s2 + $0x10] sm:$0xff]
  %v344 = vld [vmem:[%s2 + $0x18] sm:$0xff]
  %346 = vset.pattern.permute.xlu0 0
  %347 = vperm.xlu0 %346, %v341
  %v348 = vpop.permute.xlu0 %347
  %351 = vset.pattern.permute.xlu0 0
  %352 = vperm.xlu0 %351, %v342
  %v353 = vpop.permute.xlu0 %352
  %356 = vset.pattern.permute.xlu0 0
  %357 = vperm.xlu0 %356, %v343
  %v358 = vpop.permute.xlu0 %357
  %361 = vset.pattern.permute.xlu0 0
  %362 = vperm.xlu0 %361, %v344
  %v363 = vpop.permute.xlu0 %362
  %v366 = vperm.slane %v328, 0
  %v368 = vmul.f32 %v348, %v366
  %v369 = vmul.f32 %v353, %v366
  %v370 = vmul.f32 %v358, %v366
  %v371 = vmul.f32 %v363, %v366
  %v372 = vmul.f32 %v337, %v368
  %v373 = vmul.f32 %v338, %v369
  %v374 = vmul.f32 %v339, %v370
  %v375 = vmul.f32 %v340, %v371
  %v376 = vpack.c.bf16 %v372, %v372
  %v377 = vpack.c.bf16 %v373, %v373
  %v378 = vpack.c.bf16 %v374, %v374
  %v379 = vpack.c.bf16 %v375, %v375
  %380 = vst [vmem:[#allocation2] sm:$0xf] %v376
  %381 = vst [vmem:[#allocation2 + $0x4] sm:$0xf] %v377
  %382 = vst [vmem:[#allocation2 + $0x8] sm:$0xf] %v378
  %383 = vst [vmem:[#allocation2 + $0xc] sm:$0xf] %v379
  %v388 = vunpack.c.l.b16 %v376
  %v389 = vunpack.c.l.b16 %v377
  %v390 = vunpack.c.l.b16 %v378
  %v391 = vunpack.c.l.b16 %v379
  %v392 = vpack.c.b16 %v389, %v388
  %v393 = vpack.c.b16 %v391, %v390
  %396 = vmatpush.bf16.msra.mxu0 %v327
  %397 = vmatpush.bf16.msra.mxu0 %v326
  %398 = vmatpush.bf16.msra.mxu0 %v325
  %399 = vmatpush.bf16.msra.mxu0 %v324
  %400 = vmatpush.bf16.msra.mxu0 %v323
  %401 = vmatpush.bf16.msra.mxu0 %v322
  %402 = vmatpush.bf16.msra.mxu0 %v321
  %403 = vmatpush.bf16.msra.mxu0 %v320
  %404 = vmatmul.bf16.gmra.mxu0 %v392
  %v405 = vpop.f32.mrf.mxu0
  %v406 = vadd.f32 0.0, %v405
  %v407 = vpop.f32.mrf.mxu0
  %v408 = vadd.f32 0.0, %v407
  %409 = vmatmul.bf16.gmra.mxu0 %v393
  %v410 = vpop.f32.mrf.mxu0
  %v411 = vadd.f32 0.0, %v410
  %v412 = vpop.f32.mrf.mxu0
  %v413 = vadd.f32 0.0, %v412
  %414 = vdwg.mxu0
  %415 = vst [vmem:[#allocation3] sm:$0xff] %v406
  %416 = vst [vmem:[#allocation3 + $0x8] sm:$0xff] %v408
  %417 = vst [vmem:[#allocation3 + $0x10] sm:$0xff] %v411
  %418 = vst [vmem:[#allocation3 + $0x18] sm:$0xff] %v413
  %s419 = sshll.u32 %s330, 4
  %420 = dma.done %s62, %s419
  %v421 = vld [vmem:[#allocation2 + $0x10] sm:$0xf]
  %v422 = vld [vmem:[#allocation2 + $0x14] sm:$0xf]
  %v423 = vld [vmem:[#allocation2 + $0x18] sm:$0xf]
  %v424 = vld [vmem:[#allocation2 + $0x1c] sm:$0xf]
  %v425 = vunpack.c.l.bf16 %v421
  %v426 = vunpack.c.l.bf16 %v422
  %v427 = vunpack.c.l.bf16 %v423
  %v428 = vunpack.c.l.bf16 %v424
  %v429 = vld [vmem:[%s2 + $0x20] sm:$0xff]
  %v430 = vld [vmem:[%s2 + $0x28] sm:$0xff]
  %v431 = vld [vmem:[%s2 + $0x30] sm:$0xff]
  %v432 = vld [vmem:[%s2 + $0x38] sm:$0xff]
  %434 = vset.pattern.permute.xlu0 0
  %435 = vperm.xlu0 %434, %v429
  %v436 = vpop.permute.xlu0 %435
  %439 = vset.pattern.permute.xlu0 0
  %440 = vperm.xlu0 %439, %v430
  %v441 = vpop.permute.xlu0 %440
  %444 = vset.pattern.permute.xlu0 0
  %445 = vperm.xlu0 %444, %v431
  %v446 = vpop.permute.xlu0 %445
  %449 = vset.pattern.permute.xlu0 0
  %450 = vperm.xlu0 %449, %v432
  %v451 = vpop.permute.xlu0 %450
  %v453 = vmul.f32 %v436, %v366
  %v454 = vmul.f32 %v441, %v366
  %v455 = vmul.f32 %v446, %v366
  %v456 = vmul.f32 %v451, %v366
  %v457 = vmul.f32 %v425, %v453
  %v458 = vmul.f32 %v426, %v454
  %v459 = vmul.f32 %v427, %v455
  %v460 = vmul.f32 %v428, %v456
  %v461 = vpack.c.bf16 %v457, %v457
  %v462 = vpack.c.bf16 %v458, %v458
  %v463 = vpack.c.bf16 %v459, %v459
  %v464 = vpack.c.bf16 %v460, %v460
  %465 = vst [vmem:[#allocation2 + $0x10] sm:$0xf] %v461
  %466 = vst [vmem:[#allocation2 + $0x14] sm:$0xf] %v462
  %467 = vst [vmem:[#allocation2 + $0x18] sm:$0xf] %v463
  %468 = vst [vmem:[#allocation2 + $0x1c] sm:$0xf] %v464
  %v473 = vunpack.c.l.b16 %v461
  %v474 = vunpack.c.l.b16 %v462
  %v475 = vunpack.c.l.b16 %v463
  %v476 = vunpack.c.l.b16 %v464
  %v477 = vpack.c.b16 %v474, %v473
  %v478 = vpack.c.b16 %v476, %v475
  %481 = vmatpush.bf16.msra.mxu0 %v327
  %482 = vmatpush.bf16.msra.mxu0 %v326
  %483 = vmatpush.bf16.msra.mxu0 %v325
  %484 = vmatpush.bf16.msra.mxu0 %v324
  %485 = vmatpush.bf16.msra.mxu0 %v323
  %486 = vmatpush.bf16.msra.mxu0 %v322
  %487 = vmatpush.bf16.msra.mxu0 %v321
  %488 = vmatpush.bf16.msra.mxu0 %v320
  %489 = vmatmul.bf16.gmra.mxu0 %v477
  %v490 = vpop.f32.mrf.mxu0
  %v491 = vadd.f32 0.0, %v490
  %v492 = vpop.f32.mrf.mxu0
  %v493 = vadd.f32 0.0, %v492
  %494 = vmatmul.bf16.gmra.mxu0 %v478
  %v495 = vpop.f32.mrf.mxu0
  %v496 = vadd.f32 0.0, %v495
  %v497 = vpop.f32.mrf.mxu0
  %v498 = vadd.f32 0.0, %v497
  %499 = vdwg.mxu0
  %500 = vst [vmem:[#allocation3 + $0x20] sm:$0xff] %v491
  %501 = vst [vmem:[#allocation3 + $0x28] sm:$0xff] %v493
  %502 = vst [vmem:[#allocation3 + $0x30] sm:$0xff] %v496
  %503 = vst [vmem:[#allocation3 + $0x38] sm:$0xff] %v498
  %s504 = sshll.u32 %s330, 4
  %505 = dma.done %s85, %s504
  %v506 = vld [vmem:[#allocation2 + $0x20] sm:$0xf]
  %v507 = vld [vmem:[#allocation2 + $0x24] sm:$0xf]
  %v508 = vld [vmem:[#allocation2 + $0x28] sm:$0xf]
  %v509 = vld [vmem:[#allocation2 + $0x2c] sm:$0xf]
  %v510 = vunpack.c.l.bf16 %v506
  %v511 = vunpack.c.l.bf16 %v507
  %v512 = vunpack.c.l.bf16 %v508
  %v513 = vunpack.c.l.bf16 %v509
  %v514 = vld [vmem:[%s2 + $0x40] sm:$0xff]
  %v515 = vld [vmem:[%s2 + $0x48] sm:$0xff]
  %v516 = vld [vmem:[%s2 + $0x50] sm:$0xff]
  %v517 = vld [vmem:[%s2 + $0x58] sm:$0xff]
  %519 = vset.pattern.permute.xlu0 0
  %520 = vperm.xlu0 %519, %v514
  %v521 = vpop.permute.xlu0 %520
  %524 = vset.pattern.permute.xlu0 0
  %525 = vperm.xlu0 %524, %v515
  %v526 = vpop.permute.xlu0 %525
  %529 = vset.pattern.permute.xlu0 0
  %530 = vperm.xlu0 %529, %v516
  %v531 = vpop.permute.xlu0 %530
  %534 = vset.pattern.permute.xlu0 0
  %535 = vperm.xlu0 %534, %v517
  %v536 = vpop.permute.xlu0 %535
  %v538 = vmul.f32 %v521, %v366
  %v539 = vmul.f32 %v526, %v366
  %v540 = vmul.f32 %v531, %v366
  %v541 = vmul.f32 %v536, %v366
  %v542 = vmul.f32 %v510, %v538
  %v543 = vmul.f32 %v511, %v539
  %v544 = vmul.f32 %v512, %v540
  %v545 = vmul.f32 %v513, %v541
  %v546 = vpack.c.bf16 %v542, %v542
  %v547 = vpack.c.bf16 %v543, %v543
  %v548 = vpack.c.bf16 %v544, %v544
  %v549 = vpack.c.bf16 %v545, %v545
  %550 = vst [vmem:[#allocation2 + $0x20] sm:$0xf] %v546
  %551 = vst [vmem:[#allocation2 + $0x24] sm:$0xf] %v547
  %552 = vst [vmem:[#allocation2 + $0x28] sm:$0xf] %v548
  %553 = vst [vmem:[#allocation2 + $0x2c] sm:$0xf] %v549
  %v558 = vunpack.c.l.b16 %v546
  %v559 = vunpack.c.l.b16 %v547
  %v560 = vunpack.c.l.b16 %v548
  %v561 = vunpack.c.l.b16 %v549
  %v562 = vpack.c.b16 %v559, %v558
  %v563 = vpack.c.b16 %v561, %v560
  %566 = vmatpush.bf16.msra.mxu0 %v327
  %567 = vmatpush.bf16.msra.mxu0 %v326
  %568 = vmatpush.bf16.msra.mxu0 %v325
  %569 = vmatpush.bf16.msra.mxu0 %v324
  %570 = vmatpush.bf16.msra.mxu0 %v323
  %571 = vmatpush.bf16.msra.mxu0 %v322
  %572 = vmatpush.bf16.msra.mxu0 %v321
  %573 = vmatpush.bf16.msra.mxu0 %v320
  %574 = vmatmul.bf16.gmra.mxu0 %v562
  %v575 = vpop.f32.mrf.mxu0
  %v576 = vadd.f32 0.0, %v575
  %v577 = vpop.f32.mrf.mxu0
  %v578 = vadd.f32 0.0, %v577
  %579 = vmatmul.bf16.gmra.mxu0 %v563
  %v580 = vpop.f32.mrf.mxu0
  %v581 = vadd.f32 0.0, %v580
  %v582 = vpop.f32.mrf.mxu0
  %v583 = vadd.f32 0.0, %v582
  %584 = vdwg.mxu0
  %585 = vst [vmem:[#allocation3 + $0x40] sm:$0xff] %v576
  %586 = vst [vmem:[#allocation3 + $0x48] sm:$0xff] %v578
  %587 = vst [vmem:[#allocation3 + $0x50] sm:$0xff] %v581
  %588 = vst [vmem:[#allocation3 + $0x58] sm:$0xff] %v583
  %s589 = sshll.u32 %s330, 4
  %590 = dma.done %s108, %s589
  %v591 = vld [vmem:[#allocation2 + $0x30] sm:$0xf]
  %v592 = vld [vmem:[#allocation2 + $0x34] sm:$0xf]
  %v593 = vld [vmem:[#allocation2 + $0x38] sm:$0xf]
  %v594 = vld [vmem:[#allocation2 + $0x3c] sm:$0xf]
  %v595 = vunpack.c.l.bf16 %v591
  %v596 = vunpack.c.l.bf16 %v592
  %v597 = vunpack.c.l.bf16 %v593
  %v598 = vunpack.c.l.bf16 %v594
  %v599 = vld [vmem:[%s2 + $0x60] sm:$0xff]
  %v600 = vld [vmem:[%s2 + $0x68] sm:$0xff]
  %v601 = vld [vmem:[%s2 + $0x70] sm:$0xff]
  %v602 = vld [vmem:[%s2 + $0x78] sm:$0xff]
  %604 = vset.pattern.permute.xlu0 0
  %605 = vperm.xlu0 %604, %v599
  %v606 = vpop.permute.xlu0 %605
  %609 = vset.pattern.permute.xlu0 0
  %610 = vperm.xlu0 %609, %v600
  %v611 = vpop.permute.xlu0 %610
  %614 = vset.pattern.permute.xlu0 0
  %615 = vperm.xlu0 %614, %v601
  %v616 = vpop.permute.xlu0 %615
  %619 = vset.pattern.permute.xlu0 0
  %620 = vperm.xlu0 %619, %v602
  %v621 = vpop.permute.xlu0 %620
  %v623 = vmul.f32 %v606, %v366
  %v624 = vmul.f32 %v611, %v366
  %v625 = vmul.f32 %v616, %v366
  %v626 = vmul.f32 %v621, %v366
  %v627 = vmul.f32 %v595, %v623
  %v628 = vmul.f32 %v596, %v624
  %v629 = vmul.f32 %v597, %v625
  %v630 = vmul.f32 %v598, %v626
  %v631 = vpack.c.bf16 %v627, %v627
  %v632 = vpack.c.bf16 %v628, %v628
  %v633 = vpack.c.bf16 %v629, %v629
  %v634 = vpack.c.bf16 %v630, %v630
  %635 = vst [vmem:[#allocation2 + $0x30] sm:$0xf] %v631
  %636 = vst [vmem:[#allocation2 + $0x34] sm:$0xf] %v632
  %637 = vst [vmem:[#allocation2 + $0x38] sm:$0xf] %v633
  %638 = vst [vmem:[#allocation2 + $0x3c] sm:$0xf] %v634
  %v643 = vunpack.c.l.b16 %v631
  %v644 = vunpack.c.l.b16 %v632
  %v645 = vunpack.c.l.b16 %v633
  %v646 = vunpack.c.l.b16 %v634
  %v647 = vpack.c.b16 %v644, %v643
  %v648 = vpack.c.b16 %v646, %v645
  %651 = vmatpush.bf16.msra.mxu0 %v327
  %652 = vmatpush.bf16.msra.mxu0 %v326
  %653 = vmatpush.bf16.msra.mxu0 %v325
  %654 = vmatpush.bf16.msra.mxu0 %v324
  %655 = vmatpush.bf16.msra.mxu0 %v323
  %656 = vmatpush.bf16.msra.mxu0 %v322
  %657 = vmatpush.bf16.msra.mxu0 %v321
  %658 = vmatpush.bf16.msra.mxu0 %v320
  %659 = vmatmul.bf16.gmra.mxu0 %v647
  %v660 = vpop.f32.mrf.mxu0
  %v661 = vadd.f32 0.0, %v660
  %v662 = vpop.f32.mrf.mxu0
  %v663 = vadd.f32 0.0, %v662
  %664 = vmatmul.bf16.gmra.mxu0 %v648
  %v665 = vpop.f32.mrf.mxu0
  %v666 = vadd.f32 0.0, %v665
  %v667 = vpop.f32.mrf.mxu0
  %v668 = vadd.f32 0.0, %v667
  %669 = vdwg.mxu0
  %670 = vst [vmem:[#allocation3 + $0x60] sm:$0xff] %v661
  %671 = vst [vmem:[#allocation3 + $0x68] sm:$0xff] %v663
  %672 = vst [vmem:[#allocation3 + $0x70] sm:$0xff] %v666
  %673 = vst [vmem:[#allocation3 + $0x78] sm:$0xff] %v668
  %v674 = vld [vmem:[#allocation2] sm:$0xf]
  %v675 = vld [vmem:[#allocation2 + $0x4] sm:$0xf]
  %v676 = vld [vmem:[#allocation2 + $0x8] sm:$0xf]
  %v677 = vld [vmem:[#allocation2 + $0xc] sm:$0xf]
  %v678 = vld [vmem:[#allocation2 + $0x10] sm:$0xf]
  %v679 = vld [vmem:[#allocation2 + $0x14] sm:$0xf]
  %v680 = vld [vmem:[#allocation2 + $0x18] sm:$0xf]
  %v681 = vld [vmem:[#allocation2 + $0x1c] sm:$0xf]
  %v682 = vld [vmem:[#allocation2 + $0x20] sm:$0xf]
  %v683 = vld [vmem:[#allocation2 + $0x24] sm:$0xf]
  %v684 = vld [vmem:[#allocation2 + $0x28] sm:$0xf]
  %v685 = vld [vmem:[#allocation2 + $0x2c] sm:$0xf]
  %v686 = vld [vmem:[#allocation2 + $0x30] sm:$0xf]
  %v687 = vld [vmem:[#allocation2 + $0x34] sm:$0xf]
  %v688 = vld [vmem:[#allocation2 + $0x38] sm:$0xf]
  %v689 = vld [vmem:[#allocation2 + $0x3c] sm:$0xf]
  %v690 = vld [vmem:[#allocation3] sm:$0xff]
  %v691 = vld [vmem:[#allocation3 + $0x8] sm:$0xff]
  %v692 = vld [vmem:[#allocation3 + $0x10] sm:$0xff]
  %v693 = vld [vmem:[#allocation3 + $0x18] sm:$0xff]
  %v694 = vld [vmem:[#allocation3 + $0x20] sm:$0xff]
  %v695 = vld [vmem:[#allocation3 + $0x28] sm:$0xff]
  %v696 = vld [vmem:[#allocation3 + $0x30] sm:$0xff]
  %v697 = vld [vmem:[#allocation3 + $0x38] sm:$0xff]
  %v698 = vld [vmem:[#allocation3 + $0x40] sm:$0xff]
  %v699 = vld [vmem:[#allocation3 + $0x48] sm:$0xff]
  %v700 = vld [vmem:[#allocation3 + $0x50] sm:$0xff]
  %v701 = vld [vmem:[#allocation3 + $0x58] sm:$0xff]
  %v702 = vld [vmem:[#allocation3 + $0x60] sm:$0xff]
  %v703 = vld [vmem:[#allocation3 + $0x68] sm:$0xff]
  %v704 = vld [vmem:[#allocation3 + $0x70] sm:$0xff]
  %v705 = vld [vmem:[#allocation3 + $0x78] sm:$0xff]
  %v706 = vpack.c.bf16 %v691, %v690
  %v707 = vpack.c.bf16 %v693, %v692
  %v708 = vpack.c.bf16 %v695, %v694
  %v709 = vpack.c.bf16 %v697, %v696
  %v710 = vpack.c.bf16 %v699, %v698
  %v711 = vpack.c.bf16 %v701, %v700
  %v712 = vpack.c.bf16 %v703, %v702
  %v713 = vpack.c.bf16 %v705, %v704
  %v730 = vunpack.c.l.b16 %v674
  %v731 = vunpack.c.l.b16 %v675
  %v732 = vunpack.c.l.b16 %v676
  %v733 = vunpack.c.l.b16 %v677
  %v734 = vunpack.c.l.b16 %v678
  %v735 = vunpack.c.l.b16 %v679
  %v736 = vunpack.c.l.b16 %v680
  %v737 = vunpack.c.l.b16 %v681
  %v738 = vunpack.c.l.b16 %v682
  %v739 = vunpack.c.l.b16 %v683
  %v740 = vunpack.c.l.b16 %v684
  %v741 = vunpack.c.l.b16 %v685
  %v742 = vunpack.c.l.b16 %v686
  %v743 = vunpack.c.l.b16 %v687
  %v744 = vunpack.c.l.b16 %v688
  %v745 = vunpack.c.l.b16 %v689
  %v746 = vpack.c.b16 %v731, %v730
  %v747 = vpack.c.b16 %v733, %v732
  %v748 = vpack.c.b16 %v735, %v734
  %v749 = vpack.c.b16 %v737, %v736
  %v750 = vpack.c.b16 %v739, %v738
  %v751 = vpack.c.b16 %v741, %v740
  %v752 = vpack.c.b16 %v743, %v742
  %v753 = vpack.c.b16 %v745, %v744
  %762 = vmatpush.bf16.msra.mxu0 %v713
  %763 = vmatpush.bf16.msra.mxu0 %v712
  %764 = vmatpush.bf16.msra.mxu0 %v711
  %765 = vmatpush.bf16.msra.mxu0 %v710
  %766 = vmatpush.bf16.msra.mxu0 %v709
  %767 = vmatpush.bf16.msra.mxu0 %v708
  %768 = vmatpush.bf16.msra.mxu0 %v707
  %769 = vmatpush.bf16.msra.mxu0 %v706
  %770 = vmatmul.bf16.gmra.mxu0 %v746
  %v771 = vpop.f32.mrf.mxu0
  %v772 = vadd.f32 0.0, %v771
  %v773 = vpop.f32.mrf.mxu0
  %v774 = vadd.f32 0.0, %v773
  %775 = vmatmul.bf16.gmra.mxu0 %v747
  %v776 = vpop.f32.mrf.mxu0
  %v777 = vadd.f32 0.0, %v776
  %v778 = vpop.f32.mrf.mxu0
  %v779 = vadd.f32 0.0, %v778
  %780 = vmatmul.bf16.gmra.mxu0 %v748
  %v781 = vpop.f32.mrf.mxu0
  %v782 = vadd.f32 0.0, %v781
  %v783 = vpop.f32.mrf.mxu0
  %v784 = vadd.f32 0.0, %v783
  %785 = vmatmul.bf16.gmra.mxu0 %v749
  %v786 = vpop.f32.mrf.mxu0
  %v787 = vadd.f32 0.0, %v786
  %v788 = vpop.f32.mrf.mxu0
  %v789 = vadd.f32 0.0, %v788
  %790 = vmatmul.bf16.gmra.mxu0 %v750
  %v791 = vpop.f32.mrf.mxu0
  %v792 = vadd.f32 0.0, %v791
  %v793 = vpop.f32.mrf.mxu0
  %v794 = vadd.f32 0.0, %v793
  %795 = vmatmul.bf16.gmra.mxu0 %v751
  %v796 = vpop.f32.mrf.mxu0
  %v797 = vadd.f32 0.0, %v796
  %v798 = vpop.f32.mrf.mxu0
  %v799 = vadd.f32 0.0, %v798
  %800 = vmatmul.bf16.gmra.mxu0 %v752
  %v801 = vpop.f32.mrf.mxu0
  %v802 = vadd.f32 0.0, %v801
  %v803 = vpop.f32.mrf.mxu0
  %v804 = vadd.f32 0.0, %v803
  %805 = vmatmul.bf16.gmra.mxu0 %v753
  %v806 = vpop.f32.mrf.mxu0
  %v807 = vadd.f32 0.0, %v806
  %v808 = vpop.f32.mrf.mxu0
  %v809 = vadd.f32 0.0, %v808
  %810 = vdwg.mxu0
  %vm811 = vcmask 523264
  %v812 = vsel %vm811, %v772, %v690
  %v813 = vsel %vm811, %v774, %v691
  %v814 = vsel %vm811, %v777, %v692
  %v815 = vsel %vm811, %v779, %v693
  %v816 = vsel %vm811, %v782, %v694
  %v817 = vsel %vm811, %v784, %v695
  %v818 = vsel %vm811, %v787, %v696
  %v819 = vsel %vm811, %v789, %v697
  %v820 = vsel %vm811, %v792, %v698
  %v821 = vsel %vm811, %v794, %v699
  %v822 = vsel %vm811, %v797, %v700
  %v823 = vsel %vm811, %v799, %v701
  %v824 = vsel %vm811, %v802, %v702
  %v825 = vsel %vm811, %v804, %v703
  %v826 = vsel %vm811, %v807, %v704
  %v827 = vsel %vm811, %v809, %v705
  %v828 = vld [vmem:[%s5] sm:$0x3]
  %v830 = vperm.slane %v828, 0
  %v831 = vperm.slane %v828, 1
  %v834 = vadd.f32 %v812, %v830
  %v835 = vadd.f32 %v281, %v831
  %v836 = vadd.f32 %v813, %v830
  %v837 = vadd.f32 %v283, %v831
  %v838 = vadd.f32 %v814, %v830
  %v839 = vadd.f32 %v286, %v831
  %v840 = vadd.f32 %v815, %v830
  %v841 = vadd.f32 %v288, %v831
  %v842 = vadd.f32 %v816, %v830
  %v843 = vadd.f32 %v291, %v831
  %v844 = vadd.f32 %v817, %v830
  %v845 = vadd.f32 %v293, %v831
  %v846 = vadd.f32 %v818, %v830
  %v847 = vadd.f32 %v296, %v831
  %v848 = vadd.f32 %v819, %v830
  %v849 = vadd.f32 %v298, %v831
  %v850 = vadd.f32 %v820, %v830
  %v851 = vadd.f32 %v301, %v831
  %v852 = vadd.f32 %v821, %v830
  %v853 = vadd.f32 %v303, %v831
  %v854 = vadd.f32 %v822, %v830
  %v855 = vadd.f32 %v306, %v831
  %v856 = vadd.f32 %v823, %v830
  %v857 = vadd.f32 %v308, %v831
  %v858 = vadd.f32 %v824, %v830
  %v859 = vadd.f32 %v311, %v831
  %v860 = vadd.f32 %v825, %v830
  %v861 = vadd.f32 %v313, %v831
  %v862 = vadd.f32 %v826, %v830
  %v863 = vadd.f32 %v316, %v831
  %v864 = vadd.f32 %v827, %v830
  %v865 = vadd.f32 %v318, %v831
  %v866 = vpack.c.bf16 %v836, %v834
  %v867 = vpack.c.bf16 %v837, %v835
  %v868 = vpack.c.bf16 %v840, %v838
  %v869 = vpack.c.bf16 %v841, %v839
  %v870 = vpack.c.bf16 %v844, %v842
  %v871 = vpack.c.bf16 %v845, %v843
  %v872 = vpack.c.bf16 %v848, %v846
  %v873 = vpack.c.bf16 %v849, %v847
  %v874 = vpack.c.bf16 %v852, %v850
  %v875 = vpack.c.bf16 %v853, %v851
  %v876 = vpack.c.bf16 %v856, %v854
  %v877 = vpack.c.bf16 %v857, %v855
  %v878 = vpack.c.bf16 %v860, %v858
  %v879 = vpack.c.bf16 %v861, %v859
  %v880 = vpack.c.bf16 %v864, %v862
  %v881 = vpack.c.bf16 %v865, %v863
  %v882 = vld [vmem:[%s6] sm:$0xff]
  %v883 = vld [vmem:[%s6 + $0x8] sm:$0xff]
  %v884 = vld [vmem:[%s6 + $0x10] sm:$0xff]
  %v885 = vld [vmem:[%s6 + $0x18] sm:$0xff]
  %v886 = vld [vmem:[%s6 + $0x20] sm:$0xff]
  %v887 = vld [vmem:[%s6 + $0x28] sm:$0xff]
  %v888 = vld [vmem:[%s6 + $0x30] sm:$0xff]
  %v889 = vld [vmem:[%s6 + $0x38] sm:$0xff]
  %v890 = vld [vmem:[%s6 + $0x40] sm:$0xff]
  %v891 = vld [vmem:[%s6 + $0x48] sm:$0xff]
  %v892 = vld [vmem:[%s6 + $0x50] sm:$0xff]
  %v893 = vld [vmem:[%s6 + $0x58] sm:$0xff]
  %v894 = vld [vmem:[%s6 + $0x60] sm:$0xff]
  %v895 = vld [vmem:[%s6 + $0x68] sm:$0xff]
  %v896 = vld [vmem:[%s6 + $0x70] sm:$0xff]
  %v897 = vld [vmem:[%s6 + $0x78] sm:$0xff]
  %v898 = vld [vmem:[%s6 + $0x80] sm:$0xff]
  %v899 = vld [vmem:[%s6 + $0x88] sm:$0xff]
  %v900 = vld [vmem:[%s6 + $0x90] sm:$0xff]
  %v901 = vld [vmem:[%s6 + $0x98] sm:$0xff]
  %v902 = vld [vmem:[%s6 + $0xa0] sm:$0xff]
  %v903 = vld [vmem:[%s6 + $0xa8] sm:$0xff]
  %v904 = vld [vmem:[%s6 + $0xb0] sm:$0xff]
  %v905 = vld [vmem:[%s6 + $0xb8] sm:$0xff]
  %v930 = vunpack.c.l.b16 %v882
  %v931 = vunpack.c.h.b16 %v882
  %v932 = vunpack.c.l.b16 %v883
  %v933 = vunpack.c.h.b16 %v883
  %v934 = vunpack.c.l.b16 %v884
  %v935 = vunpack.c.h.b16 %v884
  %v936 = vunpack.c.l.b16 %v885
  %v937 = vunpack.c.h.b16 %v885
  %v938 = vunpack.c.l.b16 %v886
  %v939 = vunpack.c.h.b16 %v886
  %v940 = vunpack.c.l.b16 %v887
  %v941 = vunpack.c.h.b16 %v887
  %v942 = vunpack.c.l.b16 %v888
  %v943 = vunpack.c.h.b16 %v888
  %v944 = vunpack.c.l.b16 %v889
  %v945 = vunpack.c.h.b16 %v889
  %v946 = vunpack.c.l.b16 %v890
  %v947 = vunpack.c.h.b16 %v890
  %v948 = vunpack.c.l.b16 %v891
  %v949 = vunpack.c.h.b16 %v891
  %v950 = vunpack.c.l.b16 %v892
  %v951 = vunpack.c.h.b16 %v892
  %v952 = vunpack.c.l.b16 %v893
  %v953 = vunpack.c.h.b16 %v893
  %v954 = vunpack.c.l.b16 %v894
  %v955 = vunpack.c.h.b16 %v894
  %v956 = vunpack.c.l.b16 %v895
  %v957 = vunpack.c.h.b16 %v895
  %v958 = vunpack.c.l.b16 %v896
  %v959 = vunpack.c.h.b16 %v896
  %v960 = vunpack.c.l.b16 %v897
  %v961 = vunpack.c.h.b16 %v897
  %v962 = vunpack.c.l.b16 %v898
  %v963 = vunpack.c.h.b16 %v898
  %v964 = vunpack.c.l.b16 %v899
  %v965 = vunpack.c.h.b16 %v899
  %v966 = vunpack.c.l.b16 %v900
  %v967 = vunpack.c.h.b16 %v900
  %v968 = vunpack.c.l.b16 %v901
  %v969 = vunpack.c.h.b16 %v901
  %v970 = vunpack.c.l.b16 %v902
  %v971 = vunpack.c.h.b16 %v902
  %v972 = vunpack.c.l.b16 %v903
  %v973 = vunpack.c.h.b16 %v903
  %v974 = vunpack.c.l.b16 %v904
  %v975 = vunpack.c.h.b16 %v904
  %v976 = vunpack.c.l.b16 %v905
  %v977 = vunpack.c.h.b16 %v905
  %v978 = vpack.c.b16 %v932, %v930
  %v979 = vpack.c.b16 %v933, %v931
  %v980 = vpack.c.b16 %v936, %v934
  %v981 = vpack.c.b16 %v937, %v935
  %v982 = vpack.c.b16 %v940, %v938
  %v983 = vpack.c.b16 %v941, %v939
  %v984 = vpack.c.b16 %v944, %v942
  %v985 = vpack.c.b16 %v945, %v943
  %v986 = vpack.c.b16 %v948, %v946
  %v987 = vpack.c.b16 %v949, %v947
  %v988 = vpack.c.b16 %v952, %v950
  %v989 = vpack.c.b16 %v953, %v951
  %v990 = vpack.c.b16 %v956, %v954
  %v991 = vpack.c.b16 %v957, %v955
  %v992 = vpack.c.b16 %v960, %v958
  %v993 = vpack.c.b16 %v961, %v959
  %v994 = vpack.c.b16 %v964, %v962
  %v995 = vpack.c.b16 %v965, %v963
  %v996 = vpack.c.b16 %v968, %v966
  %v997 = vpack.c.b16 %v969, %v967
  %v998 = vpack.c.b16 %v972, %v970
  %v999 = vpack.c.b16 %v973, %v971
  %v1000 = vpack.c.b16 %v976, %v974
  %v1001 = vpack.c.b16 %v977, %v975
  %v1027 = vsel %vm811, %v867, 0
  %v1030 = vsel %vm811, %v869, 0
  %v1033 = vsel %vm811, %v871, 0
  %v1036 = vsel %vm811, %v873, 0
  %v1039 = vsel %vm811, %v875, 0
  %v1042 = vsel %vm811, %v877, 0
  %v1045 = vsel %vm811, %v879, 0
  %v1048 = vsel %vm811, %v881, 0
  %1050 = vmatpush.bf16.msra.mxu0 %v992
  %1051 = vmatpush.bf16.msra.mxu0 %v990
  %1052 = vmatpush.bf16.msra.mxu0 %v988
  %1053 = vmatpush.bf16.msra.mxu0 %v986
  %1054 = vmatpush.bf16.msra.mxu0 %v984
  %1055 = vmatpush.bf16.msra.mxu0 %v982
  %1056 = vmatpush.bf16.msra.mxu0 %v980
  %1057 = vmatpush.bf16.msra.mxu0 %v978
  %1058 = vmatmul.bf16.gmra.mxu0 %v866
  %v1059 = vpop.f32.mrf.mxu0
  %v1060 = vadd.f32 0.0, %v1059
  %v1061 = vpop.f32.mrf.mxu0
  %v1062 = vadd.f32 0.0, %v1061
  %1063 = vmatmul.bf16.gmra.mxu0 %v868
  %v1064 = vpop.f32.mrf.mxu0
  %v1065 = vadd.f32 0.0, %v1064
  %v1066 = vpop.f32.mrf.mxu0
  %v1067 = vadd.f32 0.0, %v1066
  %1068 = vmatmul.bf16.gmra.mxu0 %v870
  %v1069 = vpop.f32.mrf.mxu0
  %v1070 = vadd.f32 0.0, %v1069
  %v1071 = vpop.f32.mrf.mxu0
  %v1072 = vadd.f32 0.0, %v1071
  %1073 = vmatmul.bf16.gmra.mxu0 %v872
  %v1074 = vpop.f32.mrf.mxu0
  %v1075 = vadd.f32 0.0, %v1074
  %v1076 = vpop.f32.mrf.mxu0
  %v1077 = vadd.f32 0.0, %v1076
  %1078 = vmatmul.bf16.gmra.mxu0 %v874
  %v1079 = vpop.f32.mrf.mxu0
  %v1080 = vadd.f32 0.0, %v1079
  %v1081 = vpop.f32.mrf.mxu0
  %v1082 = vadd.f32 0.0, %v1081
  %1083 = vmatmul.bf16.gmra.mxu0 %v876
  %v1084 = vpop.f32.mrf.mxu0
  %v1085 = vadd.f32 0.0, %v1084
  %v1086 = vpop.f32.mrf.mxu0
  %v1087 = vadd.f32 0.0, %v1086
  %1088 = vmatmul.bf16.gmra.mxu0 %v878
  %v1089 = vpop.f32.mrf.mxu0
  %v1090 = vadd.f32 0.0, %v1089
  %v1091 = vpop.f32.mrf.mxu0
  %v1092 = vadd.f32 0.0, %v1091
  %1093 = vmatmul.bf16.gmra.mxu0 %v880
  %v1094 = vpop.f32.mrf.mxu0
  %v1095 = vadd.f32 0.0, %v1094
  %v1096 = vpop.f32.mrf.mxu0
  %v1097 = vadd.f32 0.0, %v1096
  %1098 = vdwg.mxu0
  %1099 = vmatpush.bf16.msra.mxu0 0
  %1100 = vmatpush.bf16.msra.mxu0 0
  %1101 = vmatpush.bf16.msra.mxu0 0
  %1102 = vmatpush.bf16.msra.mxu0 0
  %1103 = vmatpush.bf16.msra.mxu0 %v1000
  %1104 = vmatpush.bf16.msra.mxu0 %v998
  %1105 = vmatpush.bf16.msra.mxu0 %v996
  %1106 = vmatpush.bf16.msra.mxu0 %v994
  %1107 = vmatmul.bf16.gmra.mxu0 %v1027
  %v1108 = vpop.f32.mrf.mxu0
  %v1109 = vadd.f32 %v1060, %v1108
  %v1110 = vpop.f32.mrf.mxu0
  %v1111 = vadd.f32 %v1062, %v1110
  %1112 = vmatmul.bf16.gmra.mxu0 %v1030
  %v1113 = vpop.f32.mrf.mxu0
  %v1114 = vadd.f32 %v1065, %v1113
  %v1115 = vpop.f32.mrf.mxu0
  %v1116 = vadd.f32 %v1067, %v1115
  %1117 = vmatmul.bf16.gmra.mxu0 %v1033
  %v1118 = vpop.f32.mrf.mxu0
  %v1119 = vadd.f32 %v1070, %v1118
  %v1120 = vpop.f32.mrf.mxu0
  %v1121 = vadd.f32 %v1072, %v1120
  %1122 = vmatmul.bf16.gmra.mxu0 %v1036
  %v1123 = vpop.f32.mrf.mxu0
  %v1124 = vadd.f32 %v1075, %v1123
  %v1125 = vpop.f32.mrf.mxu0
  %v1126 = vadd.f32 %v1077, %v1125
  %1127 = vmatmul.bf16.gmra.mxu0 %v1039
  %v1128 = vpop.f32.mrf.mxu0
  %v1129 = vadd.f32 %v1080, %v1128
  %v1130 = vpop.f32.mrf.mxu0
  %v1131 = vadd.f32 %v1082, %v1130
  %1132 = vmatmul.bf16.gmra.mxu0 %v1042
  %v1133 = vpop.f32.mrf.mxu0
  %v1134 = vadd.f32 %v1085, %v1133
  %v1135 = vpop.f32.mrf.mxu0
  %v1136 = vadd.f32 %v1087, %v1135
  %1137 = vmatmul.bf16.gmra.mxu0 %v1045
  %v1138 = vpop.f32.mrf.mxu0
  %v1139 = vadd.f32 %v1090, %v1138
  %v1140 = vpop.f32.mrf.mxu0
  %v1141 = vadd.f32 %v1092, %v1140
  %1142 = vmatmul.bf16.gmra.mxu0 %v1048
  %v1143 = vpop.f32.mrf.mxu0
  %v1144 = vadd.f32 %v1095, %v1143
  %v1145 = vpop.f32.mrf.mxu0
  %v1146 = vadd.f32 %v1097, %v1145
  %1147 = vdwg.mxu0
  %1148 = vmatpush.bf16.msra.mxu0 %v993
  %1149 = vmatpush.bf16.msra.mxu0 %v991
  %1150 = vmatpush.bf16.msra.mxu0 %v989
  %1151 = vmatpush.bf16.msra.mxu0 %v987
  %1152 = vmatpush.bf16.msra.mxu0 %v985
  %1153 = vmatpush.bf16.msra.mxu0 %v983
  %1154 = vmatpush.bf16.msra.mxu0 %v981
  %1155 = vmatpush.bf16.msra.mxu0 %v979
  %1156 = vmatmul.bf16.gmra.mxu0 %v866
  %v1157 = vpop.f32.mrf.mxu0
  %v1158 = vadd.f32 0.0, %v1157
  %v1159 = vpop.f32.mrf.mxu0
  %v1160 = vadd.f32 0.0, %v1159
  %1161 = vmatmul.bf16.gmra.mxu0 %v868
  %v1162 = vpop.f32.mrf.mxu0
  %v1163 = vadd.f32 0.0, %v1162
  %v1164 = vpop.f32.mrf.mxu0
  %v1165 = vadd.f32 0.0, %v1164
  %1166 = vmatmul.bf16.gmra.mxu0 %v870
  %v1167 = vpop.f32.mrf.mxu0
  %v1168 = vadd.f32 0.0, %v1167
  %v1169 = vpop.f32.mrf.mxu0
  %v1170 = vadd.f32 0.0, %v1169
  %1171 = vmatmul.bf16.gmra.mxu0 %v872
  %v1172 = vpop.f32.mrf.mxu0
  %v1173 = vadd.f32 0.0, %v1172
  %v1174 = vpop.f32.mrf.mxu0
  %v1175 = vadd.f32 0.0, %v1174
  %1176 = vmatmul.bf16.gmra.mxu0 %v874
  %v1177 = vpop.f32.mrf.mxu0
  %v1178 = vadd.f32 0.0, %v1177
  %v1179 = vpop.f32.mrf.mxu0
  %v1180 = vadd.f32 0.0, %v1179
  %1181 = vmatmul.bf16.gmra.mxu0 %v876
  %v1182 = vpop.f32.mrf.mxu0
  %v1183 = vadd.f32 0.0, %v1182
  %v1184 = vpop.f32.mrf.mxu0
  %v1185 = vadd.f32 0.0, %v1184
  %1186 = vmatmul.bf16.gmra.mxu0 %v878
  %v1187 = vpop.f32.mrf.mxu0
  %v1188 = vadd.f32 0.0, %v1187
  %v1189 = vpop.f32.mrf.mxu0
  %v1190 = vadd.f32 0.0, %v1189
  %1191 = vmatmul.bf16.gmra.mxu0 %v880
  %v1192 = vpop.f32.mrf.mxu0
  %v1193 = vadd.f32 0.0, %v1192
  %v1194 = vpop.f32.mrf.mxu0
  %v1195 = vadd.f32 0.0, %v1194
  %1196 = vdwg.mxu0
  %1197 = vmatpush.bf16.msra.mxu0 0
  %1198 = vmatpush.bf16.msra.mxu0 0
  %1199 = vmatpush.bf16.msra.mxu0 0
  %1200 = vmatpush.bf16.msra.mxu0 0
  %1201 = vmatpush.bf16.msra.mxu0 %v1001
  %1202 = vmatpush.bf16.msra.mxu0 %v999
  %1203 = vmatpush.bf16.msra.mxu0 %v997
  %1204 = vmatpush.bf16.msra.mxu0 %v995
  %1205 = vmatmul.bf16.gmra.mxu0 %v1027
  %v1206 = vpop.f32.mrf.mxu0
  %v1207 = vadd.f32 %v1158, %v1206
  %v1208 = vpop.f32.mrf.mxu0
  %v1209 = vadd.f32 %v1160, %v1208
  %1210 = vmatmul.bf16.gmra.mxu0 %v1030
  %v1211 = vpop.f32.mrf.mxu0
  %v1212 = vadd.f32 %v1163, %v1211
  %v1213 = vpop.f32.mrf.mxu0
  %v1214 = vadd.f32 %v1165, %v1213
  %1215 = vmatmul.bf16.gmra.mxu0 %v1033
  %v1216 = vpop.f32.mrf.mxu0
  %v1217 = vadd.f32 %v1168, %v1216
  %v1218 = vpop.f32.mrf.mxu0
  %v1219 = vadd.f32 %v1170, %v1218
  %1220 = vmatmul.bf16.gmra.mxu0 %v1036
  %v1221 = vpop.f32.mrf.mxu0
  %v1222 = vadd.f32 %v1173, %v1221
  %v1223 = vpop.f32.mrf.mxu0
  %v1224 = vadd.f32 %v1175, %v1223
  %1225 = vmatmul.bf16.gmra.mxu0 %v1039
  %v1226 = vpop.f32.mrf.mxu0
  %v1227 = vadd.f32 %v1178, %v1226
  %v1228 = vpop.f32.mrf.mxu0
  %v1229 = vadd.f32 %v1180, %v1228
  %1230 = vmatmul.bf16.gmra.mxu0 %v1042
  %v1231 = vpop.f32.mrf.mxu0
  %v1232 = vadd.f32 %v1183, %v1231
  %v1233 = vpop.f32.mrf.mxu0
  %v1234 = vadd.f32 %v1185, %v1233
  %1235 = vmatmul.bf16.gmra.mxu0 %v1045
  %v1236 = vpop.f32.mrf.mxu0
  %v1237 = vadd.f32 %v1188, %v1236
  %v1238 = vpop.f32.mrf.mxu0
  %v1239 = vadd.f32 %v1190, %v1238
  %1240 = vmatmul.bf16.gmra.mxu0 %v1048
  %v1241 = vpop.f32.mrf.mxu0
  %v1242 = vadd.f32 %v1193, %v1241
  %v1243 = vpop.f32.mrf.mxu0
  %v1244 = vadd.f32 %v1195, %v1243
  %1245 = vdwg.mxu0
  %v1246 = vpack.c.bf16 %v1111, %v1109
  %v1247 = vpack.c.bf16 %v1116, %v1114
  %v1248 = vpack.c.bf16 %v1121, %v1119
  %v1249 = vpack.c.bf16 %v1126, %v1124
  %v1250 = vpack.c.bf16 %v1131, %v1129
  %v1251 = vpack.c.bf16 %v1136, %v1134
  %v1252 = vpack.c.bf16 %v1141, %v1139
  %v1253 = vpack.c.bf16 %v1146, %v1144
  %1254 = vmatpush.bf16.msra.mxu0 %v1253
  %1255 = vmatpush.bf16.msra.mxu0 %v1252
  %1256 = vmatpush.bf16.msra.mxu0 %v1251
  %1257 = vmatpush.bf16.msra.mxu0 %v1250
  %1258 = vmatpush.bf16.msra.mxu0 %v1249
  %1259 = vmatpush.bf16.msra.mxu0 %v1248
  %1260 = vmatpush.bf16.msra.mxu0 %v1247
  %1261 = vmatpush.bf16.msra.mxu0 %v1246
  %1262 = vmatmul.bf16.gmra.mxu0 %v746
  %v1263 = vpop.f32.mrf.mxu0
  %v1264 = vadd.f32 0.0, %v1263
  %v1265 = vpop.f32.mrf.mxu0
  %v1266 = vadd.f32 0.0, %v1265
  %1267 = vmatmul.bf16.gmra.mxu0 %v747
  %v1268 = vpop.f32.mrf.mxu0
  %v1269 = vadd.f32 0.0, %v1268
  %v1270 = vpop.f32.mrf.mxu0
  %v1271 = vadd.f32 0.0, %v1270
  %1272 = vmatmul.bf16.gmra.mxu0 %v748
  %v1273 = vpop.f32.mrf.mxu0
  %v1274 = vadd.f32 0.0, %v1273
  %v1275 = vpop.f32.mrf.mxu0
  %v1276 = vadd.f32 0.0, %v1275
  %1277 = vmatmul.bf16.gmra.mxu0 %v749
  %v1278 = vpop.f32.mrf.mxu0
  %v1279 = vadd.f32 0.0, %v1278
  %v1280 = vpop.f32.mrf.mxu0
  %v1281 = vadd.f32 0.0, %v1280
  %1282 = vmatmul.bf16.gmra.mxu0 %v750
  %v1283 = vpop.f32.mrf.mxu0
  %v1284 = vadd.f32 0.0, %v1283
  %v1285 = vpop.f32.mrf.mxu0
  %v1286 = vadd.f32 0.0, %v1285
  %1287 = vmatmul.bf16.gmra.mxu0 %v751
  %v1288 = vpop.f32.mrf.mxu0
  %v1289 = vadd.f32 0.0, %v1288
  %v1290 = vpop.f32.mrf.mxu0
  %v1291 = vadd.f32 0.0, %v1290
  %1292 = vmatmul.bf16.gmra.mxu0 %v752
  %v1293 = vpop.f32.mrf.mxu0
  %v1294 = vadd.f32 0.0, %v1293
  %v1295 = vpop.f32.mrf.mxu0
  %v1296 = vadd.f32 0.0, %v1295
  %1297 = vmatmul.bf16.gmra.mxu0 %v753
  %v1298 = vpop.f32.mrf.mxu0
  %v1299 = vadd.f32 0.0, %v1298
  %v1300 = vpop.f32.mrf.mxu0
  %v1301 = vadd.f32 0.0, %v1300
  %1302 = vdwg.mxu0
  %v1303 = vpack.c.bf16 %v1266, %v1264
  %v1304 = vpack.c.bf16 %v1271, %v1269
  %v1305 = vpack.c.bf16 %v1276, %v1274
  %v1306 = vpack.c.bf16 %v1281, %v1279
  %v1307 = vpack.c.bf16 %v1286, %v1284
  %v1308 = vpack.c.bf16 %v1291, %v1289
  %v1309 = vpack.c.bf16 %v1296, %v1294
  %v1310 = vpack.c.bf16 %v1301, %v1299
  %1311 = vmatpush.bf16.msra.mxu0 %v1310
  %1312 = vmatpush.bf16.msra.mxu0 %v1309
  %1313 = vmatpush.bf16.msra.mxu0 %v1308
  %1314 = vmatpush.bf16.msra.mxu0 %v1307
  %1315 = vmatpush.bf16.msra.mxu0 %v1306
  %1316 = vmatpush.bf16.msra.mxu0 %v1305
  %1317 = vmatpush.bf16.msra.mxu0 %v1304
  %1318 = vmatpush.bf16.msra.mxu0 %v1303
  %1319 = vmatmul.bf16.gmra.mxu0 %v746
  %v1320 = vpop.f32.mrf.mxu0
  %v1321 = vadd.f32 0.0, %v1320
  %v1322 = vpop.f32.mrf.mxu0
  %v1323 = vadd.f32 0.0, %v1322
  %1324 = vmatmul.bf16.gmra.mxu0 %v747
  %v1325 = vpop.f32.mrf.mxu0
  %v1326 = vadd.f32 0.0, %v1325
  %v1327 = vpop.f32.mrf.mxu0
  %v1328 = vadd.f32 0.0, %v1327
  %1329 = vmatmul.bf16.gmra.mxu0 %v748
  %v1330 = vpop.f32.mrf.mxu0
  %v1331 = vadd.f32 0.0, %v1330
  %v1332 = vpop.f32.mrf.mxu0
  %v1333 = vadd.f32 0.0, %v1332
  %1334 = vmatmul.bf16.gmra.mxu0 %v749
  %v1335 = vpop.f32.mrf.mxu0
  %v1336 = vadd.f32 0.0, %v1335
  %v1337 = vpop.f32.mrf.mxu0
  %v1338 = vadd.f32 0.0, %v1337
  %1339 = vmatmul.bf16.gmra.mxu0 %v750
  %v1340 = vpop.f32.mrf.mxu0
  %v1341 = vadd.f32 0.0, %v1340
  %v1342 = vpop.f32.mrf.mxu0
  %v1343 = vadd.f32 0.0, %v1342
  %1344 = vmatmul.bf16.gmra.mxu0 %v751
  %v1345 = vpop.f32.mrf.mxu0
  %v1346 = vadd.f32 0.0, %v1345
  %v1347 = vpop.f32.mrf.mxu0
  %v1348 = vadd.f32 0.0, %v1347
  %1349 = vmatmul.bf16.gmra.mxu0 %v752
  %v1350 = vpop.f32.mrf.mxu0
  %v1351 = vadd.f32 0.0, %v1350
  %v1352 = vpop.f32.mrf.mxu0
  %v1353 = vadd.f32 0.0, %v1352
  %1354 = vmatmul.bf16.gmra.mxu0 %v753
  %v1355 = vpop.f32.mrf.mxu0
  %v1356 = vadd.f32 0.0, %v1355
  %v1357 = vpop.f32.mrf.mxu0
  %v1358 = vadd.f32 0.0, %v1357
  %1359 = vdwg.mxu0
  %v1360 = vsel %vm811, %v1321, %v1264
  %v1361 = vsel %vm811, %v1323, %v1266
  %v1362 = vsel %vm811, %v1326, %v1269
  %v1363 = vsel %vm811, %v1328, %v1271
  %v1364 = vsel %vm811, %v1331, %v1274
  %v1365 = vsel %vm811, %v1333, %v1276
  %v1366 = vsel %vm811, %v1336, %v1279
  %v1367 = vsel %vm811, %v1338, %v1281
  %v1368 = vsel %vm811, %v1341, %v1284
  %v1369 = vsel %vm811, %v1343, %v1286
  %v1370 = vsel %vm811, %v1346, %v1289
  %v1371 = vsel %vm811, %v1348, %v1291
  %v1372 = vsel %vm811, %v1351, %v1294
  %v1373 = vsel %vm811, %v1353, %v1296
  %v1374 = vsel %vm811, %v1356, %v1299
  %v1375 = vsel %vm811, %v1358, %v1301
  %v1376 = vld [vmem:[%s7] sm:$0x3]
  %v1378 = vperm.slane %v1376, 0
  %v1379 = vperm.slane %v1376, 1
  %v1382 = vadd.f32 %v1360, %v1378
  %v1383 = vadd.f32 %v1207, %v1379
  %v1384 = vadd.f32 %v1361, %v1378
  %v1385 = vadd.f32 %v1209, %v1379
  %v1386 = vadd.f32 %v1362, %v1378
  %v1387 = vadd.f32 %v1212, %v1379
  %v1388 = vadd.f32 %v1363, %v1378
  %v1389 = vadd.f32 %v1214, %v1379
  %v1390 = vadd.f32 %v1364, %v1378
  %v1391 = vadd.f32 %v1217, %v1379
  %v1392 = vadd.f32 %v1365, %v1378
  %v1393 = vadd.f32 %v1219, %v1379
  %v1394 = vadd.f32 %v1366, %v1378
  %v1395 = vadd.f32 %v1222, %v1379
  %v1396 = vadd.f32 %v1367, %v1378
  %v1397 = vadd.f32 %v1224, %v1379
  %v1398 = vadd.f32 %v1368, %v1378
  %v1399 = vadd.f32 %v1227, %v1379
  %v1400 = vadd.f32 %v1369, %v1378
  %v1401 = vadd.f32 %v1229, %v1379
  %v1402 = vadd.f32 %v1370, %v1378
  %v1403 = vadd.f32 %v1232, %v1379
  %v1404 = vadd.f32 %v1371, %v1378
  %v1405 = vadd.f32 %v1234, %v1379
  %v1406 = vadd.f32 %v1372, %v1378
  %v1407 = vadd.f32 %v1237, %v1379
  %v1408 = vadd.f32 %v1373, %v1378
  %v1409 = vadd.f32 %v1239, %v1379
  %v1410 = vadd.f32 %v1374, %v1378
  %v1411 = vadd.f32 %v1242, %v1379
  %v1412 = vadd.f32 %v1375, %v1378
  %v1413 = vadd.f32 %v1244, %v1379
  %v1414 = vpack.c.bf16 %v1384, %v1382
  %v1415 = vpack.c.bf16 %v1385, %v1383
  %v1416 = vpack.c.bf16 %v1388, %v1386
  %v1417 = vpack.c.bf16 %v1389, %v1387
  %v1418 = vpack.c.bf16 %v1392, %v1390
  %v1419 = vpack.c.bf16 %v1393, %v1391
  %v1420 = vpack.c.bf16 %v1396, %v1394
  %v1421 = vpack.c.bf16 %v1397, %v1395
  %v1422 = vpack.c.bf16 %v1400, %v1398
  %v1423 = vpack.c.bf16 %v1401, %v1399
  %v1424 = vpack.c.bf16 %v1404, %v1402
  %v1425 = vpack.c.bf16 %v1405, %v1403
  %v1426 = vpack.c.bf16 %v1408, %v1406
  %v1427 = vpack.c.bf16 %v1409, %v1407
  %v1428 = vpack.c.bf16 %v1412, %v1410
  %v1429 = vpack.c.bf16 %v1413, %v1411
  %v1430 = vld [vmem:[%s8] sm:$0xff]
  %v1431 = vld [vmem:[%s8 + $0x8] sm:$0xff]
  %v1432 = vld [vmem:[%s8 + $0x10] sm:$0xff]
  %v1433 = vld [vmem:[%s8 + $0x18] sm:$0xff]
  %v1434 = vld [vmem:[%s8 + $0x20] sm:$0xff]
  %v1435 = vld [vmem:[%s8 + $0x28] sm:$0xff]
  %v1436 = vld [vmem:[%s8 + $0x30] sm:$0xff]
  %v1437 = vld [vmem:[%s8 + $0x38] sm:$0xff]
  %v1438 = vld [vmem:[%s8 + $0x40] sm:$0xff]
  %v1439 = vld [vmem:[%s8 + $0x48] sm:$0xff]
  %v1440 = vld [vmem:[%s8 + $0x50] sm:$0xff]
  %v1441 = vld [vmem:[%s8 + $0x58] sm:$0xff]
  %v1442 = vld [vmem:[%s8 + $0x60] sm:$0xff]
  %v1443 = vld [vmem:[%s8 + $0x68] sm:$0xff]
  %v1444 = vld [vmem:[%s8 + $0x70] sm:$0xff]
  %v1445 = vld [vmem:[%s8 + $0x78] sm:$0xff]
  %v1446 = vld [vmem:[%s8 + $0x80] sm:$0xff]
  %v1447 = vld [vmem:[%s8 + $0x88] sm:$0xff]
  %v1448 = vld [vmem:[%s8 + $0x90] sm:$0xff]
  %v1449 = vld [vmem:[%s8 + $0x98] sm:$0xff]
  %v1450 = vld [vmem:[%s8 + $0xa0] sm:$0xff]
  %v1451 = vld [vmem:[%s8 + $0xa8] sm:$0xff]
  %v1452 = vld [vmem:[%s8 + $0xb0] sm:$0xff]
  %v1453 = vld [vmem:[%s8 + $0xb8] sm:$0xff]
  %v1478 = vunpack.c.l.b16 %v1430
  %v1479 = vunpack.c.h.b16 %v1430
  %v1480 = vunpack.c.l.b16 %v1431
  %v1481 = vunpack.c.h.b16 %v1431
  %v1482 = vunpack.c.l.b16 %v1432
  %v1483 = vunpack.c.h.b16 %v1432
  %v1484 = vunpack.c.l.b16 %v1433
  %v1485 = vunpack.c.h.b16 %v1433
  %v1486 = vunpack.c.l.b16 %v1434
  %v1487 = vunpack.c.h.b16 %v1434
  %v1488 = vunpack.c.l.b16 %v1435
  %v1489 = vunpack.c.h.b16 %v1435
  %v1490 = vunpack.c.l.b16 %v1436
  %v1491 = vunpack.c.h.b16 %v1436
  %v1492 = vunpack.c.l.b16 %v1437
  %v1493 = vunpack.c.h.b16 %v1437
  %v1494 = vunpack.c.l.b16 %v1438
  %v1495 = vunpack.c.h.b16 %v1438
  %v1496 = vunpack.c.l.b16 %v1439
  %v1497 = vunpack.c.h.b16 %v1439
  %v1498 = vunpack.c.l.b16 %v1440
  %v1499 = vunpack.c.h.b16 %v1440
  %v1500 = vunpack.c.l.b16 %v1441
  %v1501 = vunpack.c.h.b16 %v1441
  %v1502 = vunpack.c.l.b16 %v1442
  %v1503 = vunpack.c.h.b16 %v1442
  %v1504 = vunpack.c.l.b16 %v1443
  %v1505 = vunpack.c.h.b16 %v1443
  %v1506 = vunpack.c.l.b16 %v1444
  %v1507 = vunpack.c.h.b16 %v1444
  %v1508 = vunpack.c.l.b16 %v1445
  %v1509 = vunpack.c.h.b16 %v1445
  %v1510 = vunpack.c.l.b16 %v1446
  %v1511 = vunpack.c.h.b16 %v1446
  %v1512 = vunpack.c.l.b16 %v1447
  %v1513 = vunpack.c.h.b16 %v1447
  %v1514 = vunpack.c.l.b16 %v1448
  %v1515 = vunpack.c.h.b16 %v1448
  %v1516 = vunpack.c.l.b16 %v1449
  %v1517 = vunpack.c.h.b16 %v1449
  %v1518 = vunpack.c.l.b16 %v1450
  %v1519 = vunpack.c.h.b16 %v1450
  %v1520 = vunpack.c.l.b16 %v1451
  %v1521 = vunpack.c.h.b16 %v1451
  %v1522 = vunpack.c.l.b16 %v1452
  %v1523 = vunpack.c.h.b16 %v1452
  %v1524 = vunpack.c.l.b16 %v1453
  %v1525 = vunpack.c.h.b16 %v1453
  %v1526 = vpack.c.b16 %v1480, %v1478
  %v1527 = vpack.c.b16 %v1481, %v1479
  %v1528 = vpack.c.b16 %v1484, %v1482
  %v1529 = vpack.c.b16 %v1485, %v1483
  %v1530 = vpack.c.b16 %v1488, %v1486
  %v1531 = vpack.c.b16 %v1489, %v1487
  %v1532 = vpack.c.b16 %v1492, %v1490
  %v1533 = vpack.c.b16 %v1493, %v1491
  %v1534 = vpack.c.b16 %v1496, %v1494
  %v1535 = vpack.c.b16 %v1497, %v1495
  %v1536 = vpack.c.b16 %v1500, %v1498
  %v1537 = vpack.c.b16 %v1501, %v1499
  %v1538 = vpack.c.b16 %v1504, %v1502
  %v1539 = vpack.c.b16 %v1505, %v1503
  %v1540 = vpack.c.b16 %v1508, %v1506
  %v1541 = vpack.c.b16 %v1509, %v1507
  %v1542 = vpack.c.b16 %v1512, %v1510
  %v1543 = vpack.c.b16 %v1513, %v1511
  %v1544 = vpack.c.b16 %v1516, %v1514
  %v1545 = vpack.c.b16 %v1517, %v1515
  %v1546 = vpack.c.b16 %v1520, %v1518
  %v1547 = vpack.c.b16 %v1521, %v1519
  %v1548 = vpack.c.b16 %v1524, %v1522
  %v1549 = vpack.c.b16 %v1525, %v1523
  %v1575 = vsel %vm811, %v1415, 0
  %v1578 = vsel %vm811, %v1417, 0
  %v1581 = vsel %vm811, %v1419, 0
  %v1584 = vsel %vm811, %v1421, 0
  %v1587 = vsel %vm811, %v1423, 0
  %v1590 = vsel %vm811, %v1425, 0
  %v1593 = vsel %vm811, %v1427, 0
  %v1596 = vsel %vm811, %v1429, 0
  %1598 = vmatpush.bf16.msra.mxu0 %v1540
  %1599 = vmatpush.bf16.msra.mxu0 %v1538
  %1600 = vmatpush.bf16.msra.mxu0 %v1536
  %1601 = vmatpush.bf16.msra.mxu0 %v1534
  %1602 = vmatpush.bf16.msra.mxu0 %v1532
  %1603 = vmatpush.bf16.msra.mxu0 %v1530
  %1604 = vmatpush.bf16.msra.mxu0 %v1528
  %1605 = vmatpush.bf16.msra.mxu0 %v1526
  %1606 = vmatmul.bf16.gmra.mxu0 %v1414
  %v1607 = vpop.f32.mrf.mxu0
  %v1608 = vadd.f32 0.0, %v1607
  %v1609 = vpop.f32.mrf.mxu0
  %v1610 = vadd.f32 0.0, %v1609
  %1611 = vmatmul.bf16.gmra.mxu0 %v1416
  %v1612 = vpop.f32.mrf.mxu0
  %v1613 = vadd.f32 0.0, %v1612
  %v1614 = vpop.f32.mrf.mxu0
  %v1615 = vadd.f32 0.0, %v1614
  %1616 = vmatmul.bf16.gmra.mxu0 %v1418
  %v1617 = vpop.f32.mrf.mxu0
  %v1618 = vadd.f32 0.0, %v1617
  %v1619 = vpop.f32.mrf.mxu0
  %v1620 = vadd.f32 0.0, %v1619
  %1621 = vmatmul.bf16.gmra.mxu0 %v1420
  %v1622 = vpop.f32.mrf.mxu0
  %v1623 = vadd.f32 0.0, %v1622
  %v1624 = vpop.f32.mrf.mxu0
  %v1625 = vadd.f32 0.0, %v1624
  %1626 = vmatmul.bf16.gmra.mxu0 %v1422
  %v1627 = vpop.f32.mrf.mxu0
  %v1628 = vadd.f32 0.0, %v1627
  %v1629 = vpop.f32.mrf.mxu0
  %v1630 = vadd.f32 0.0, %v1629
  %1631 = vmatmul.bf16.gmra.mxu0 %v1424
  %v1632 = vpop.f32.mrf.mxu0
  %v1633 = vadd.f32 0.0, %v1632
  %v1634 = vpop.f32.mrf.mxu0
  %v1635 = vadd.f32 0.0, %v1634
  %1636 = vmatmul.bf16.gmra.mxu0 %v1426
  %v1637 = vpop.f32.mrf.mxu0
  %v1638 = vadd.f32 0.0, %v1637
  %v1639 = vpop.f32.mrf.mxu0
  %v1640 = vadd.f32 0.0, %v1639
  %1641 = vmatmul.bf16.gmra.mxu0 %v1428
  %v1642 = vpop.f32.mrf.mxu0
  %v1643 = vadd.f32 0.0, %v1642
  %v1644 = vpop.f32.mrf.mxu0
  %v1645 = vadd.f32 0.0, %v1644
  %1646 = vdwg.mxu0
  %1647 = vmatpush.bf16.msra.mxu0 0
  %1648 = vmatpush.bf16.msra.mxu0 0
  %1649 = vmatpush.bf16.msra.mxu0 0
  %1650 = vmatpush.bf16.msra.mxu0 0
  %1651 = vmatpush.bf16.msra.mxu0 %v1548
  %1652 = vmatpush.bf16.msra.mxu0 %v1546
  %1653 = vmatpush.bf16.msra.mxu0 %v1544
  %1654 = vmatpush.bf16.msra.mxu0 %v1542
  %1655 = vmatmul.bf16.gmra.mxu0 %v1575
  %v1656 = vpop.f32.mrf.mxu0
  %v1657 = vadd.f32 %v1608, %v1656
  %v1658 = vpop.f32.mrf.mxu0
  %v1659 = vadd.f32 %v1610, %v1658
  %1660 = vmatmul.bf16.gmra.mxu0 %v1578
  %v1661 = vpop.f32.mrf.mxu0
  %v1662 = vadd.f32 %v1613, %v1661
  %v1663 = vpop.f32.mrf.mxu0
  %v1664 = vadd.f32 %v1615, %v1663
  %1665 = vmatmul.bf16.gmra.mxu0 %v1581
  %v1666 = vpop.f32.mrf.mxu0
  %v1667 = vadd.f32 %v1618, %v1666
  %v1668 = vpop.f32.mrf.mxu0
  %v1669 = vadd.f32 %v1620, %v1668
  %1670 = vmatmul.bf16.gmra.mxu0 %v1584
  %v1671 = vpop.f32.mrf.mxu0
  %v1672 = vadd.f32 %v1623, %v1671
  %v1673 = vpop.f32.mrf.mxu0
  %v1674 = vadd.f32 %v1625, %v1673
  %1675 = vmatmul.bf16.gmra.mxu0 %v1587
  %v1676 = vpop.f32.mrf.mxu0
  %v1677 = vadd.f32 %v1628, %v1676
  %v1678 = vpop.f32.mrf.mxu0
  %v1679 = vadd.f32 %v1630, %v1678
  %1680 = vmatmul.bf16.gmra.mxu0 %v1590
  %v1681 = vpop.f32.mrf.mxu0
  %v1682 = vadd.f32 %v1633, %v1681
  %v1683 = vpop.f32.mrf.mxu0
  %v1684 = vadd.f32 %v1635, %v1683
  %1685 = vmatmul.bf16.gmra.mxu0 %v1593
  %v1686 = vpop.f32.mrf.mxu0
  %v1687 = vadd.f32 %v1638, %v1686
  %v1688 = vpop.f32.mrf.mxu0
  %v1689 = vadd.f32 %v1640, %v1688
  %1690 = vmatmul.bf16.gmra.mxu0 %v1596
  %v1691 = vpop.f32.mrf.mxu0
  %v1692 = vadd.f32 %v1643, %v1691
  %v1693 = vpop.f32.mrf.mxu0
  %v1694 = vadd.f32 %v1645, %v1693
  %1695 = vdwg.mxu0
  %1696 = vmatpush.bf16.msra.mxu0 %v1541
  %1697 = vmatpush.bf16.msra.mxu0 %v1539
  %1698 = vmatpush.bf16.msra.mxu0 %v1537
  %1699 = vmatpush.bf16.msra.mxu0 %v1535
  %1700 = vmatpush.bf16.msra.mxu0 %v1533
  %1701 = vmatpush.bf16.msra.mxu0 %v1531
  %1702 = vmatpush.bf16.msra.mxu0 %v1529
  %1703 = vmatpush.bf16.msra.mxu0 %v1527
  %1704 = vmatmul.bf16.gmra.mxu0 %v1414
  %v1705 = vpop.f32.mrf.mxu0
  %v1706 = vadd.f32 0.0, %v1705
  %v1707 = vpop.f32.mrf.mxu0
  %v1708 = vadd.f32 0.0, %v1707
  %1709 = vmatmul.bf16.gmra.mxu0 %v1416
  %v1710 = vpop.f32.mrf.mxu0
  %v1711 = vadd.f32 0.0, %v1710
  %v1712 = vpop.f32.mrf.mxu0
  %v1713 = vadd.f32 0.0, %v1712
  %1714 = vmatmul.bf16.gmra.mxu0 %v1418
  %v1715 = vpop.f32.mrf.mxu0
  %v1716 = vadd.f32 0.0, %v1715
  %v1717 = vpop.f32.mrf.mxu0
  %v1718 = vadd.f32 0.0, %v1717
  %1719 = vmatmul.bf16.gmra.mxu0 %v1420
  %v1720 = vpop.f32.mrf.mxu0
  %v1721 = vadd.f32 0.0, %v1720
  %v1722 = vpop.f32.mrf.mxu0
  %v1723 = vadd.f32 0.0, %v1722
  %1724 = vmatmul.bf16.gmra.mxu0 %v1422
  %v1725 = vpop.f32.mrf.mxu0
  %v1726 = vadd.f32 0.0, %v1725
  %v1727 = vpop.f32.mrf.mxu0
  %v1728 = vadd.f32 0.0, %v1727
  %1729 = vmatmul.bf16.gmra.mxu0 %v1424
  %v1730 = vpop.f32.mrf.mxu0
  %v1731 = vadd.f32 0.0, %v1730
  %v1732 = vpop.f32.mrf.mxu0
  %v1733 = vadd.f32 0.0, %v1732
  %1734 = vmatmul.bf16.gmra.mxu0 %v1426
  %v1735 = vpop.f32.mrf.mxu0
  %v1736 = vadd.f32 0.0, %v1735
  %v1737 = vpop.f32.mrf.mxu0
  %v1738 = vadd.f32 0.0, %v1737
  %1739 = vmatmul.bf16.gmra.mxu0 %v1428
  %v1740 = vpop.f32.mrf.mxu0
  %v1741 = vadd.f32 0.0, %v1740
  %v1742 = vpop.f32.mrf.mxu0
  %v1743 = vadd.f32 0.0, %v1742
  %1744 = vdwg.mxu0
  %1745 = vmatpush.bf16.msra.mxu0 0
  %1746 = vmatpush.bf16.msra.mxu0 0
  %1747 = vmatpush.bf16.msra.mxu0 0
  %1748 = vmatpush.bf16.msra.mxu0 0
  %1749 = vmatpush.bf16.msra.mxu0 %v1549
  %1750 = vmatpush.bf16.msra.mxu0 %v1547
  %1751 = vmatpush.bf16.msra.mxu0 %v1545
  %1752 = vmatpush.bf16.msra.mxu0 %v1543
  %1753 = vmatmul.bf16.gmra.mxu0 %v1575
  %v1754 = vpop.f32.mrf.mxu0
  %v1755 = vadd.f32 %v1706, %v1754
  %v1756 = vpop.f32.mrf.mxu0
  %v1757 = vadd.f32 %v1708, %v1756
  %1758 = vmatmul.bf16.gmra.mxu0 %v1578
  %v1759 = vpop.f32.mrf.mxu0
  %v1760 = vadd.f32 %v1711, %v1759
  %v1761 = vpop.f32.mrf.mxu0
  %v1762 = vadd.f32 %v1713, %v1761
  %1763 = vmatmul.bf16.gmra.mxu0 %v1581
  %v1764 = vpop.f32.mrf.mxu0
  %v1765 = vadd.f32 %v1716, %v1764
  %v1766 = vpop.f32.mrf.mxu0
  %v1767 = vadd.f32 %v1718, %v1766
  %1768 = vmatmul.bf16.gmra.mxu0 %v1584
  %v1769 = vpop.f32.mrf.mxu0
  %v1770 = vadd.f32 %v1721, %v1769
  %v1771 = vpop.f32.mrf.mxu0
  %v1772 = vadd.f32 %v1723, %v1771
  %1773 = vmatmul.bf16.gmra.mxu0 %v1587
  %v1774 = vpop.f32.mrf.mxu0
  %v1775 = vadd.f32 %v1726, %v1774
  %v1776 = vpop.f32.mrf.mxu0
  %v1777 = vadd.f32 %v1728, %v1776
  %1778 = vmatmul.bf16.gmra.mxu0 %v1590
  %v1779 = vpop.f32.mrf.mxu0
  %v1780 = vadd.f32 %v1731, %v1779
  %v1781 = vpop.f32.mrf.mxu0
  %v1782 = vadd.f32 %v1733, %v1781
  %1783 = vmatmul.bf16.gmra.mxu0 %v1593
  %v1784 = vpop.f32.mrf.mxu0
  %v1785 = vadd.f32 %v1736, %v1784
  %v1786 = vpop.f32.mrf.mxu0
  %v1787 = vadd.f32 %v1738, %v1786
  %1788 = vmatmul.bf16.gmra.mxu0 %v1596
  %v1789 = vpop.f32.mrf.mxu0
  %v1790 = vadd.f32 %v1741, %v1789
  %v1791 = vpop.f32.mrf.mxu0
  %v1792 = vadd.f32 %v1743, %v1791
  %1793 = vdwg.mxu0
  %v1794 = vpack.c.bf16 %v1659, %v1657
  %v1795 = vpack.c.bf16 %v1664, %v1662
  %v1796 = vpack.c.bf16 %v1669, %v1667
  %v1797 = vpack.c.bf16 %v1674, %v1672
  %v1798 = vpack.c.bf16 %v1679, %v1677
  %v1799 = vpack.c.bf16 %v1684, %v1682
  %v1800 = vpack.c.bf16 %v1689, %v1687
  %v1801 = vpack.c.bf16 %v1694, %v1692
  %1802 = vmatpush.bf16.msra.mxu0 %v1801
  %1803 = vmatpush.bf16.msra.mxu0 %v1800
  %1804 = vmatpush.bf16.msra.mxu0 %v1799
  %1805 = vmatpush.bf16.msra.mxu0 %v1798
  %1806 = vmatpush.bf16.msra.mxu0 %v1797
  %1807 = vmatpush.bf16.msra.mxu0 %v1796
  %1808 = vmatpush.bf16.msra.mxu0 %v1795
  %1809 = vmatpush.bf16.msra.mxu0 %v1794
  %1810 = vmatmul.bf16.gmra.mxu0 %v746
  %v1811 = vpop.f32.mrf.mxu0
  %v1812 = vadd.f32 0.0, %v1811
  %v1813 = vpop.f32.mrf.mxu0
  %v1814 = vadd.f32 0.0, %v1813
  %1815 = vmatmul.bf16.gmra.mxu0 %v747
  %v1816 = vpop.f32.mrf.mxu0
  %v1817 = vadd.f32 0.0, %v1816
  %v1818 = vpop.f32.mrf.mxu0
  %v1819 = vadd.f32 0.0, %v1818
  %1820 = vmatmul.bf16.gmra.mxu0 %v748
  %v1821 = vpop.f32.mrf.mxu0
  %v1822 = vadd.f32 0.0, %v1821
  %v1823 = vpop.f32.mrf.mxu0
  %v1824 = vadd.f32 0.0, %v1823
  %1825 = vmatmul.bf16.gmra.mxu0 %v749
  %v1826 = vpop.f32.mrf.mxu0
  %v1827 = vadd.f32 0.0, %v1826
  %v1828 = vpop.f32.mrf.mxu0
  %v1829 = vadd.f32 0.0, %v1828
  %1830 = vmatmul.bf16.gmra.mxu0 %v750
  %v1831 = vpop.f32.mrf.mxu0
  %v1832 = vadd.f32 0.0, %v1831
  %v1833 = vpop.f32.mrf.mxu0
  %v1834 = vadd.f32 0.0, %v1833
  %1835 = vmatmul.bf16.gmra.mxu0 %v751
  %v1836 = vpop.f32.mrf.mxu0
  %v1837 = vadd.f32 0.0, %v1836
  %v1838 = vpop.f32.mrf.mxu0
  %v1839 = vadd.f32 0.0, %v1838
  %1840 = vmatmul.bf16.gmra.mxu0 %v752
  %v1841 = vpop.f32.mrf.mxu0
  %v1842 = vadd.f32 0.0, %v1841
  %v1843 = vpop.f32.mrf.mxu0
  %v1844 = vadd.f32 0.0, %v1843
  %1845 = vmatmul.bf16.gmra.mxu0 %v753
  %v1846 = vpop.f32.mrf.mxu0
  %v1847 = vadd.f32 0.0, %v1846
  %v1848 = vpop.f32.mrf.mxu0
  %v1849 = vadd.f32 0.0, %v1848
  %1850 = vdwg.mxu0
  %v1851 = vpack.c.bf16 %v1814, %v1812
  %v1852 = vpack.c.bf16 %v1819, %v1817
  %v1853 = vpack.c.bf16 %v1824, %v1822
  %v1854 = vpack.c.bf16 %v1829, %v1827
  %v1855 = vpack.c.bf16 %v1834, %v1832
  %v1856 = vpack.c.bf16 %v1839, %v1837
  %v1857 = vpack.c.bf16 %v1844, %v1842
  %v1858 = vpack.c.bf16 %v1849, %v1847
  %1859 = vmatpush.bf16.msra.mxu0 %v1858
  %1860 = vmatpush.bf16.msra.mxu0 %v1857
  %1861 = vmatpush.bf16.msra.mxu0 %v1856
  %1862 = vmatpush.bf16.msra.mxu0 %v1855
  %1863 = vmatpush.bf16.msra.mxu0 %v1854
  %1864 = vmatpush.bf16.msra.mxu0 %v1853
  %1865 = vmatpush.bf16.msra.mxu0 %v1852
  %1866 = vmatpush.bf16.msra.mxu0 %v1851
  %1867 = vmatmul.bf16.gmra.mxu0 %v746
  %v1868 = vpop.f32.mrf.mxu0
  %v1869 = vadd.f32 0.0, %v1868
  %v1870 = vpop.f32.mrf.mxu0
  %v1871 = vadd.f32 0.0, %v1870
  %1872 = vmatmul.bf16.gmra.mxu0 %v747
  %v1873 = vpop.f32.mrf.mxu0
  %v1874 = vadd.f32 0.0, %v1873
  %v1875 = vpop.f32.mrf.mxu0
  %v1876 = vadd.f32 0.0, %v1875
  %1877 = vmatmul.bf16.gmra.mxu0 %v748
  %v1878 = vpop.f32.mrf.mxu0
  %v1879 = vadd.f32 0.0, %v1878
  %v1880 = vpop.f32.mrf.mxu0
  %v1881 = vadd.f32 0.0, %v1880
  %1882 = vmatmul.bf16.gmra.mxu0 %v749
  %v1883 = vpop.f32.mrf.mxu0
  %v1884 = vadd.f32 0.0, %v1883
  %v1885 = vpop.f32.mrf.mxu0
  %v1886 = vadd.f32 0.0, %v1885
  %1887 = vmatmul.bf16.gmra.mxu0 %v750
  %v1888 = vpop.f32.mrf.mxu0
  %v1889 = vadd.f32 0.0, %v1888
  %v1890 = vpop.f32.mrf.mxu0
  %v1891 = vadd.f32 0.0, %v1890
  %1892 = vmatmul.bf16.gmra.mxu0 %v751
  %v1893 = vpop.f32.mrf.mxu0
  %v1894 = vadd.f32 0.0, %v1893
  %v1895 = vpop.f32.mrf.mxu0
  %v1896 = vadd.f32 0.0, %v1895
  %1897 = vmatmul.bf16.gmra.mxu0 %v752
  %v1898 = vpop.f32.mrf.mxu0
  %v1899 = vadd.f32 0.0, %v1898
  %v1900 = vpop.f32.mrf.mxu0
  %v1901 = vadd.f32 0.0, %v1900
  %1902 = vmatmul.bf16.gmra.mxu0 %v753
  %v1903 = vpop.f32.mrf.mxu0
  %v1904 = vadd.f32 0.0, %v1903
  %v1905 = vpop.f32.mrf.mxu0
  %v1906 = vadd.f32 0.0, %v1905
  %1907 = vdwg.mxu0
  %v1908 = vsel %vm811, %v1869, %v1812
  %v1909 = vsel %vm811, %v1871, %v1814
  %v1910 = vsel %vm811, %v1874, %v1817
  %v1911 = vsel %vm811, %v1876, %v1819
  %v1912 = vsel %vm811, %v1879, %v1822
  %v1913 = vsel %vm811, %v1881, %v1824
  %v1914 = vsel %vm811, %v1884, %v1827
  %v1915 = vsel %vm811, %v1886, %v1829
  %v1916 = vsel %vm811, %v1889, %v1832
  %v1917 = vsel %vm811, %v1891, %v1834
  %v1918 = vsel %vm811, %v1894, %v1837
  %v1919 = vsel %vm811, %v1896, %v1839
  %v1920 = vsel %vm811, %v1899, %v1842
  %v1921 = vsel %vm811, %v1901, %v1844
  %v1922 = vsel %vm811, %v1904, %v1847
  %v1923 = vsel %vm811, %v1906, %v1849
  %v1924 = vld [vmem:[%s9] sm:$0x3]
  %v1926 = vperm.slane %v1924, 0
  %v1927 = vperm.slane %v1924, 1
  %v1930 = vadd.f32 %v1908, %v1926
  %v1931 = vadd.f32 %v1755, %v1927
  %v1932 = vadd.f32 %v1909, %v1926
  %v1933 = vadd.f32 %v1757, %v1927
  %v1934 = vadd.f32 %v1910, %v1926
  %v1935 = vadd.f32 %v1760, %v1927
  %v1936 = vadd.f32 %v1911, %v1926
  %v1937 = vadd.f32 %v1762, %v1927
  %v1938 = vadd.f32 %v1912, %v1926
  %v1939 = vadd.f32 %v1765, %v1927
  %v1940 = vadd.f32 %v1913, %v1926
  %v1941 = vadd.f32 %v1767, %v1927
  %v1942 = vadd.f32 %v1914, %v1926
  %v1943 = vadd.f32 %v1770, %v1927
  %v1944 = vadd.f32 %v1915, %v1926
  %v1945 = vadd.f32 %v1772, %v1927
  %v1946 = vadd.f32 %v1916, %v1926
  %v1947 = vadd.f32 %v1775, %v1927
  %v1948 = vadd.f32 %v1917, %v1926
  %v1949 = vadd.f32 %v1777, %v1927
  %v1950 = vadd.f32 %v1918, %v1926
  %v1951 = vadd.f32 %v1780, %v1927
  %v1952 = vadd.f32 %v1919, %v1926
  %v1953 = vadd.f32 %v1782, %v1927
  %v1954 = vadd.f32 %v1920, %v1926
  %v1955 = vadd.f32 %v1785, %v1927
  %v1956 = vadd.f32 %v1921, %v1926
  %v1957 = vadd.f32 %v1787, %v1927
  %v1958 = vadd.f32 %v1922, %v1926
  %v1959 = vadd.f32 %v1790, %v1927
  %v1960 = vadd.f32 %v1923, %v1926
  %v1961 = vadd.f32 %v1792, %v1927
  %v1962 = vld [vmem:[%s10] sm:$0xff]
  %v1963 = vld [vmem:[%s10 + $0x8] sm:$0xff]
  %v1964 = vld [vmem:[%s10 + $0x10] sm:$0xff]
  %v1965 = vld [vmem:[%s10 + $0x18] sm:$0xff]
  %v1966 = vld [vmem:[%s10 + $0x20] sm:$0xff]
  %v1967 = vld [vmem:[%s10 + $0x28] sm:$0xff]
  %v1968 = vld [vmem:[%s10 + $0x30] sm:$0xff]
  %v1969 = vld [vmem:[%s10 + $0x38] sm:$0xff]
  %v1970 = vld [vmem:[%s10 + $0x40] sm:$0xff]
  %v1971 = vld [vmem:[%s10 + $0x48] sm:$0xff]
  %v1972 = vld [vmem:[%s10 + $0x50] sm:$0xff]
  %v1973 = vld [vmem:[%s10 + $0x58] sm:$0xff]
  %v1974 = vld [vmem:[%s10 + $0x60] sm:$0xff]
  %v1975 = vld [vmem:[%s10 + $0x68] sm:$0xff]
  %v1976 = vld [vmem:[%s10 + $0x70] sm:$0xff]
  %v1977 = vld [vmem:[%s10 + $0x78] sm:$0xff]
  %v1978 = vld [vmem:[%s10 + $0x80] sm:$0xff]
  %v1979 = vld [vmem:[%s10 + $0x88] sm:$0xff]
  %v1980 = vld [vmem:[%s10 + $0x90] sm:$0xff]
  %v1981 = vld [vmem:[%s10 + $0x98] sm:$0xff]
  %v1982 = vld [vmem:[%s10 + $0xa0] sm:$0xff]
  %v1983 = vld [vmem:[%s10 + $0xa8] sm:$0xff]
  %v1984 = vld [vmem:[%s10 + $0xb0] sm:$0xff]
  %v1985 = vld [vmem:[%s10 + $0xb8] sm:$0xff]
  %v1986 = vld [vmem:[%s11] sm:$0x1]
  %v1988 = vperm.slane %v1986, 0
  %v1991 = vsel %vm811, %v1931, 0
  %v1994 = vsel %vm811, %v1933, 0
  %v1997 = vsel %vm811, %v1935, 0
  %v2000 = vsel %vm811, %v1937, 0
  %v2003 = vsel %vm811, %v1939, 0
  %v2006 = vsel %vm811, %v1941, 0
  %v2009 = vsel %vm811, %v1943, 0
  %v2012 = vsel %vm811, %v1945, 0
  %v2015 = vsel %vm811, %v1947, 0
  %v2018 = vsel %vm811, %v1949, 0
  %v2021 = vsel %vm811, %v1951, 0
  %v2024 = vsel %vm811, %v1953, 0
  %v2027 = vsel %vm811, %v1955, 0
  %v2030 = vsel %vm811, %v1957, 0
  %v2033 = vsel %vm811, %v1959, 0
  %v2036 = vsel %vm811, %v1961, 0
  %2038 = vmatpush.msra.mxu0 %v1977
  %2039 = vmatpush.msra.mxu0 %v1976
  %2040 = vmatpush.msra.mxu0 %v1975
  %2041 = vmatpush.msra.mxu0 %v1974
  %2042 = vmatpush.msra.mxu0 %v1973
  %2043 = vmatpush.msra.mxu0 %v1972
  %2044 = vmatpush.msra.mxu0 %v1971
  %2045 = vmatpush.msra.mxu0 %v1970
  %2046 = vmatpush.msra.mxu0 %v1969
  %2047 = vmatpush.msra.mxu0 %v1968
  %2048 = vmatpush.msra.mxu0 %v1967
  %2049 = vmatpush.msra.mxu0 %v1966
  %2050 = vmatpush.msra.mxu0 %v1965
  %2051 = vmatpush.msra.mxu0 %v1964
  %2052 = vmatpush.msra.mxu0 %v1963
  %2053 = vmatpush.msra.mxu0 %v1962
  %2054 = vmatmul.f32.gmra.mxu0 %v1930
  %v2055 = vpop.f32.mrf.mxu0
  %v2056 = vadd.f32 %v1988, %v2055
  %2057 = vmatmul.f32.gmra.mxu0 %v1932
  %v2058 = vpop.f32.mrf.mxu0
  %v2059 = vadd.f32 %v1988, %v2058
  %2060 = vmatmul.f32.gmra.mxu0 %v1934
  %v2061 = vpop.f32.mrf.mxu0
  %v2062 = vadd.f32 %v1988, %v2061
  %2063 = vmatmul.f32.gmra.mxu0 %v1936
  %v2064 = vpop.f32.mrf.mxu0
  %v2065 = vadd.f32 %v1988, %v2064
  %2066 = vmatmul.f32.gmra.mxu0 %v1938
  %v2067 = vpop.f32.mrf.mxu0
  %v2068 = vadd.f32 %v1988, %v2067
  %2069 = vmatmul.f32.gmra.mxu0 %v1940
  %v2070 = vpop.f32.mrf.mxu0
  %v2071 = vadd.f32 %v1988, %v2070
  %2072 = vmatmul.f32.gmra.mxu0 %v1942
  %v2073 = vpop.f32.mrf.mxu0
  %v2074 = vadd.f32 %v1988, %v2073
  %2075 = vmatmul.f32.gmra.mxu0 %v1944
  %v2076 = vpop.f32.mrf.mxu0
  %v2077 = vadd.f32 %v1988, %v2076
  %2078 = vmatmul.f32.gmra.mxu0 %v1946
  %v2079 = vpop.f32.mrf.mxu0
  %v2080 = vadd.f32 %v1988, %v2079
  %2081 = vmatmul.f32.gmra.mxu0 %v1948
  %v2082 = vpop.f32.mrf.mxu0
  %v2083 = vadd.f32 %v1988, %v2082
  %2084 = vmatmul.f32.gmra.mxu0 %v1950
  %v2085 = vpop.f32.mrf.mxu0
  %v2086 = vadd.f32 %v1988, %v2085
  %2087 = vmatmul.f32.gmra.mxu0 %v1952
  %v2088 = vpop.f32.mrf.mxu0
  %v2089 = vadd.f32 %v1988, %v2088
  %2090 = vmatmul.f32.gmra.mxu0 %v1954
  %v2091 = vpop.f32.mrf.mxu0
  %v2092 = vadd.f32 %v1988, %v2091
  %2093 = vmatmul.f32.gmra.mxu0 %v1956
  %v2094 = vpop.f32.mrf.mxu0
  %v2095 = vadd.f32 %v1988, %v2094
  %2096 = vmatmul.f32.gmra.mxu0 %v1958
  %v2097 = vpop.f32.mrf.mxu0
  %v2098 = vadd.f32 %v1988, %v2097
  %2099 = vmatmul.f32.gmra.mxu0 %v1960
  %v2100 = vpop.f32.mrf.mxu0
  %v2101 = vadd.f32 %v1988, %v2100
  %2102 = vdwg.mxu0
  %2103 = vmatpush.msra.mxu0 0.0
  %2104 = vmatpush.msra.mxu0 0.0
  %2105 = vmatpush.msra.mxu0 0.0
  %2106 = vmatpush.msra.mxu0 0.0
  %2107 = vmatpush.msra.mxu0 0.0
  %2108 = vmatpush.msra.mxu0 0.0
  %2109 = vmatpush.msra.mxu0 0.0
  %2110 = vmatpush.msra.mxu0 0.0
  %2111 = vmatpush.msra.mxu0 %v1985
  %2112 = vmatpush.msra.mxu0 %v1984
  %2113 = vmatpush.msra.mxu0 %v1983
  %2114 = vmatpush.msra.mxu0 %v1982
  %2115 = vmatpush.msra.mxu0 %v1981
  %2116 = vmatpush.msra.mxu0 %v1980
  %2117 = vmatpush.msra.mxu0 %v1979
  %2118 = vmatpush.msra.mxu0 %v1978
  %2119 = vmatmul.f32.gmra.mxu0 %v1991
  %v2120 = vpop.f32.mrf.mxu0
  %v2121 = vadd.f32 %v2056, %v2120
  %2122 = vmatmul.f32.gmra.mxu0 %v1994
  %v2123 = vpop.f32.mrf.mxu0
  %v2124 = vadd.f32 %v2059, %v2123
  %2125 = vmatmul.f32.gmra.mxu0 %v1997
  %v2126 = vpop.f32.mrf.mxu0
  %v2127 = vadd.f32 %v2062, %v2126
  %2128 = vmatmul.f32.gmra.mxu0 %v2000
  %v2129 = vpop.f32.mrf.mxu0
  %v2130 = vadd.f32 %v2065, %v2129
  %2131 = vmatmul.f32.gmra.mxu0 %v2003
  %v2132 = vpop.f32.mrf.mxu0
  %v2133 = vadd.f32 %v2068, %v2132
  %2134 = vmatmul.f32.gmra.mxu0 %v2006
  %v2135 = vpop.f32.mrf.mxu0
  %v2136 = vadd.f32 %v2071, %v2135
  %2137 = vmatmul.f32.gmra.mxu0 %v2009
  %v2138 = vpop.f32.mrf.mxu0
  %v2139 = vadd.f32 %v2074, %v2138
  %2140 = vmatmul.f32.gmra.mxu0 %v2012
  %v2141 = vpop.f32.mrf.mxu0
  %v2142 = vadd.f32 %v2077, %v2141
  %2143 = vmatmul.f32.gmra.mxu0 %v2015
  %v2144 = vpop.f32.mrf.mxu0
  %v2145 = vadd.f32 %v2080, %v2144
  %2146 = vmatmul.f32.gmra.mxu0 %v2018
  %v2147 = vpop.f32.mrf.mxu0
  %v2148 = vadd.f32 %v2083, %v2147
  %2149 = vmatmul.f32.gmra.mxu0 %v2021
  %v2150 = vpop.f32.mrf.mxu0
  %v2151 = vadd.f32 %v2086, %v2150
  %2152 = vmatmul.f32.gmra.mxu0 %v2024
  %v2153 = vpop.f32.mrf.mxu0
  %v2154 = vadd.f32 %v2089, %v2153
  %2155 = vmatmul.f32.gmra.mxu0 %v2027
  %v2156 = vpop.f32.mrf.mxu0
  %v2157 = vadd.f32 %v2092, %v2156
  %2158 = vmatmul.f32.gmra.mxu0 %v2030
  %v2159 = vpop.f32.mrf.mxu0
  %v2160 = vadd.f32 %v2095, %v2159
  %2161 = vmatmul.f32.gmra.mxu0 %v2033
  %v2162 = vpop.f32.mrf.mxu0
  %v2163 = vadd.f32 %v2098, %v2162
  %2164 = vmatmul.f32.gmra.mxu0 %v2036
  %v2165 = vpop.f32.mrf.mxu0
  %v2166 = vadd.f32 %v2101, %v2165
  %2167 = vdwg.mxu0
  %2168 = vst [vmem:[%s12] sm:$0xff] %v2121
  %2169 = vst [vmem:[%s12 + $0x8] sm:$0xff] %v2124
  %2170 = vst [vmem:[%s12 + $0x10] sm:$0xff] %v2127
  %2171 = vst [vmem:[%s12 + $0x18] sm:$0xff] %v2130
  %2172 = vst [vmem:[%s12 + $0x20] sm:$0xff] %v2133
  %2173 = vst [vmem:[%s12 + $0x28] sm:$0xff] %v2136
  %2174 = vst [vmem:[%s12 + $0x30] sm:$0xff] %v2139
  %2175 = vst [vmem:[%s12 + $0x38] sm:$0xff] %v2142
  %2176 = vst [vmem:[%s12 + $0x40] sm:$0xff] %v2145
  %2177 = vst [vmem:[%s12 + $0x48] sm:$0xff] %v2148
  %2178 = vst [vmem:[%s12 + $0x50] sm:$0xff] %v2151
  %2179 = vst [vmem:[%s12 + $0x58] sm:$0xff] %v2154
  %2180 = vst [vmem:[%s12 + $0x60] sm:$0xff] %v2157
  %2181 = vst [vmem:[%s12 + $0x68] sm:$0xff] %v2160
  %2182 = vst [vmem:[%s12 + $0x70] sm:$0xff] %v2163
  %2183 = vst [vmem:[%s12 + $0x78] sm:$0xff] %v2166
  // Predicated region
  $region122: #{mixhop_forward.1} parent=0 // pred_check
    _
  $region123: #{mixhop_forward.1} parent=0 // pred_check_branch
    %2185 = sbr.rel (0) target = $region125
  $region124: #{mixhop_forward.1} parent=0 // pred_region
    _
  $region125: #{mixhop_forward.1} parent=0 // pred_fallthru
    _
  // Predicated region
  $region126: #{mixhop_forward.1} parent=0 // pred_check
    _
  $region127: #{mixhop_forward.1} parent=0 // pred_check_branch
    %2187 = sbr.rel (0) target = $region129
  $region128: #{mixhop_forward.1} parent=0 // pred_region
    _
  $region129: #{mixhop_forward.1} parent=0 // pred_fallthru
    _
  %2188 = vsyncmov [#allocation4]
  %s2189 = vpop.sfrf %2188
  %p2190 = scmp.eq.s32.totalorder %s2189, 0
  %p2191 = pneg %p2190
  %2193 = shalt.err (%p2191)
  %s2194 = scalar_lea.sflag [#allocation4], 1
  %2195 = vsyncmov %s2194
  %s2196 = vpop.sfrf %2195
  %p2197 = scmp.eq.s32.totalorder %s2196, 0
  %p2198 = pneg %p2197
  %2200 = shalt.err (%p2198)
  %s2201 = scalar_lea.sflag [#allocation4], 2
  %2202 = vsyncmov %s2201
  %s2203 = vpop.sfrf %2202
  %p2204 = scmp.eq.s32.totalorder %s2203, 0
  %p2205 = pneg %p2204
  %2207 = shalt.err (%p2205)
  %s2208 = scalar_lea.sflag [#allocation4], 3
  %2209 = vsyncmov %s2208
  %s2210 = vpop.sfrf %2209
  %p2211 = scmp.eq.s32.totalorder %s2210, 0
  %p2212 = pneg %p2211
  %2214 = shalt.err (%p2212)

</llo_original>
